<compile_context>
chip_gen: v6e
topology: v6e:2x2x1
jax: 0.10.0
libtpu: 0.0.40
codegen_flags: <defaults>
</compile_context>

<pallas_src>
import jax
import jax.numpy as jnp
from jax.experimental import pallas as pl
from jax.experimental.pallas import tpu as pltpu

# Make the pure-JAX reference and the in-kernel dots use full f32 matmul precision
# so the correctness check is meaningful.
jax.config.update("jax_default_matmul_precision", "highest")


def neighbor_mean_kernel(idx_ref, pidx_ref, mask_ref, newh_ref, pos_ref, wnT_ref, out_ref):
    """One batch element per grid step.

    idx_ref  : (1, S, N) int32   neighbor indices into new_h (0 = zero/"no neighbor" row)
    pidx_ref : (1, S, N) int32   indices into the position-encoding table
    mask_ref : (1, S, N) f32     neighbor mask
    newh_ref : (1, S+1, Hp) f32  [zeros ; h] (zero row prepended in the wrapper)
    pos_ref  : (P, Hp)   f32     position_encoding.weight (shared across the grid)
    wnT_ref  : (Hp, Hp)  f32     Wn.weight.T (shared across the grid)
    out_ref  : (1, S, Hp) f32
    """
    _, sent, n_nb = idx_ref.shape
    sent_p1 = newh_ref.shape[1]
    n_pos = pos_ref.shape[0]

    idx = idx_ref[0]      # (S, N)
    pidx = pidx_ref[0]    # (S, N)
    mask = mask_ref[0]    # (S, N)
    inv_n = 1.0 / n_nb

    # Mask-weighted one-hot aggregation matrices. The scatter is expressed as a
    # compare + lane reduce over the (small) neighbor axis, so the expensive
    # contractions below run on the MXU and no (S, N, H) temporary is ever built.
    jh = jax.lax.broadcasted_iota(jnp.int32, (sent_p1, n_nb), 0)          # jh[j, n] = j
    a_h = jnp.sum(jnp.where(idx[:, None, :] == jh[None, :, :],
                            mask[:, None, :], 0.0), axis=-1) * inv_n       # (S, S+1)
    jp = jax.lax.broadcasted_iota(jnp.int32, (n_pos, n_nb), 0)
    a_p = jnp.sum(jnp.where(pidx[:, None, :] == jp[None, :, :],
                            mask[:, None, :], 0.0), axis=-1) * inv_n       # (S, P)

    # pooled[s] = (1/N) * sum_n mask[s,n] * (new_h[idx[s,n]] + pos_table[pidx[s,n]])
    pooled = jnp.dot(a_h, newh_ref[0], preferred_element_type=jnp.float32)
    pooled = pooled + jnp.dot(a_p, pos_ref[...], preferred_element_type=jnp.float32)

    # Wn is bias-free, so it commutes with the masked mean: hn = pooled @ Wn^T.
    out_ref[0] = jnp.dot(pooled, wnT_ref[...],
                         preferred_element_type=jnp.float32).astype(out_ref.dtype)


def neighbor_mean(x, h, g, neighbor_index, neighbor_mask, pos_table, wn_weight,
                  rp_neighbor_index=None):
    """Pallas wrapper matching Neighbor_Mean.forward.

    x and g are accepted for signature parity; forward() never uses x, and g only
    provides the shape of the prepended zero row.
    """
    del x, g  # unused by Neighbor_Mean.forward
    B, S, H = h.shape
    N = neighbor_index.shape[-1]
    P = pos_table.shape[0]

    # Lane-dense padding of the hidden dim (multiple of 128) -> unmasked vst/vld.
    H_pad = ((H + 127) // 128) * 128
    pad_h = H_pad - H

    # new_h = [zeros ; h] along the sentence axis (index 0 = "no neighbor" sentinel).
    new_h = jnp.concatenate([jnp.zeros((B, 1, H), h.dtype), h], axis=1)    # (B, S+1, H)
    wnT = wn_weight.T                                                      # Linear: y = x @ W.T
    if pad_h:
        new_h = jnp.pad(new_h, ((0, 0), (0, 0), (0, pad_h)))
        pos_p = jnp.pad(pos_table, ((0, 0), (0, pad_h)))
        wnT = jnp.pad(wnT, ((0, pad_h), (0, pad_h)))
    else:
        pos_p = pos_table

    idx = neighbor_index.astype(jnp.int32)
    pidx = (rp_neighbor_index if rp_neighbor_index is not None
            else neighbor_index).astype(jnp.int32)
    mask = neighbor_mask.astype(jnp.float32)

    out = pl.pallas_call(
        neighbor_mean_kernel,
        out_shape=jax.ShapeDtypeStruct((B, S, H_pad), h.dtype),
        grid=(B,),
        in_specs=[
            pl.BlockSpec((1, S, N), lambda b: (b, 0, 0)),          # neighbor_index
            pl.BlockSpec((1, S, N), lambda b: (b, 0, 0)),          # position indices
            pl.BlockSpec((1, S, N), lambda b: (b, 0, 0)),          # neighbor_mask
            pl.BlockSpec((1, S + 1, H_pad), lambda b: (b, 0, 0)),  # [zeros ; h]
            pl.BlockSpec((P, H_pad), lambda b: (0, 0)),            # pos table (shared)
            pl.BlockSpec((H_pad, H_pad), lambda b: (0, 0)),        # Wn^T (shared)
        ],
        out_specs=pl.BlockSpec((1, S, H_pad), lambda b: (b, 0, 0)),
        compiler_params=pltpu.CompilerParams(
            dimension_semantics=("parallel",)),                    # batch tiles independent
    )(idx, pidx, mask, new_h, pos_p, wnT)
    # TODO(synk): at production scale also tile the sentence axis (h stays fully
    # resident per batch since the gather can reference any sentence).
    return out[..., :H]


def reference_neighbor_mean(h, neighbor_index, neighbor_mask, pos_table, wn_weight,
                            rp_neighbor_index=None):
    """Pure-JAX reference mirroring the PyTorch forward literally."""
    B, S, H = h.shape
    pidx = rp_neighbor_index if rp_neighbor_index is not None else neighbor_index
    pos_emb = pos_table[pidx]                                              # (B,S,N,H)
    new_h = jnp.concatenate([jnp.zeros((B, 1, H), h.dtype), h], axis=1)    # (B,S+1,H)
    b_idx = jnp.arange(B)[:, None, None]
    gathered = new_h[b_idx, neighbor_index] + pos_emb                      # (B,S,N,H)
    neighbors = jnp.einsum("bsnh,oh->bsno", gathered, wn_weight)
    neighbors = neighbors * neighbor_mask[..., None].astype(h.dtype)
    return jnp.mean(neighbors, axis=2)                                     # (B,S,H)


if __name__ == "__main__":
    B, S, N, H, E = 2, 8, 4, 32, 16   # batch, sentences, neighbors, hidden, emb
    key = jax.random.PRNGKey(0)
    ks = jax.random.split(key, 7)

    x = jax.random.normal(ks[0], (B, S, E), jnp.float32)        # unused by forward
    h = jax.random.normal(ks[1], (B, S, H), jnp.float32)
    g = jax.random.normal(ks[2], (B, H), jnp.float32)           # only its shape matters
    neighbor_index = jax.random.randint(ks[3], (B, S, N), 0, S + 1)   # 0 = "no neighbor"
    neighbor_mask = (jax.random.uniform(ks[4], (B, S, N)) > 0.3).astype(jnp.float32)
    # Module parameters actually used by forward():
    pos_table = jax.random.normal(ks[5], (S + 1, H), jnp.float32) * 0.1   # position_encoding.weight
    wn_weight = jax.random.normal(ks[6], (H, H), jnp.float32) * 0.1       # Wn.weight (out, in)
    # Wh / U / u / V are never called in forward(), so they are omitted here.

    hn = neighbor_mean(x, h, g, neighbor_index, neighbor_mask, pos_table, wn_weight)
    jax.block_until_ready(hn)

    ref = reference_neighbor_mean(h, neighbor_index, neighbor_mask, pos_table, wn_weight)
    assert hn.shape == (B, S, H)
    assert jnp.allclose(hn, ref, atol=1e-5, rtol=1e-5), float(jnp.max(jnp.abs(hn - ref)))

    print("KERNEL_OK")
</pallas_src>

<mosaic_0001>
module attributes {stable_mosaic.version = 11 : i64} {
  func.func @neighbor_mean_kernel(%arg0: i32, %arg1: memref<1x8x4xi32, #tpu.memory_space<vmem>>, %arg2: memref<1x8x4xi32, #tpu.memory_space<vmem>>, %arg3: memref<1x8x4xf32, #tpu.memory_space<vmem>>, %arg4: memref<1x9x128xf32, #tpu.memory_space<vmem>>, %arg5: memref<9x128xf32, #tpu.memory_space<vmem>>, %arg6: memref<128x128xf32, #tpu.memory_space<vmem>>, %arg7: memref<1x8x128xf32, #tpu.memory_space<vmem>>) attributes {dimension_semantics = [#tpu.dimension_semantics<parallel>], iteration_bounds = array<i64: 2>, scalar_prefetch = 0 : i64, scratch_operands = 0 : i64, tpu.core_type = #tpu.core_type<tc>, window_params = [{transform_indices = @transform_0, window_bounds = array<i64: 1, 8, 4>}, {transform_indices = @transform_1, window_bounds = array<i64: 1, 8, 4>}, {transform_indices = @transform_2, window_bounds = array<i64: 1, 8, 4>}, {transform_indices = @transform_3, window_bounds = array<i64: 1, 9, 128>}, {pipeline_mode = #tpu.pipeline_mode<synchronous>, transform_indices = @transform_4, window_bounds = array<i64: 9, 128>}, {pipeline_mode = #tpu.pipeline_mode<synchronous>, transform_indices = @transform_5, window_bounds = array<i64: 128, 128>}, {transform_indices = @transform_6, window_bounds = array<i64: 1, 8, 128>}]} {
    %c0 = arith.constant 0 : index
    %c0_0 = arith.constant 0 : index
    %c0_1 = arith.constant 0 : index
    %0 = vector.load %arg1[%c0, %c0_0, %c0_1] : memref<1x8x4xi32, #tpu.memory_space<vmem>>, vector<1x8x4xi32>
    %1 = vector.shape_cast %0 : vector<1x8x4xi32> to vector<8x4xi32>
    %c0_2 = arith.constant 0 : index
    %c0_3 = arith.constant 0 : index
    %c0_4 = arith.constant 0 : index
    %2 = vector.load %arg2[%c0_2, %c0_3, %c0_4] : memref<1x8x4xi32, #tpu.memory_space<vmem>>, vector<1x8x4xi32>
    %3 = vector.shape_cast %2 : vector<1x8x4xi32> to vector<8x4xi32>
    %c0_5 = arith.constant 0 : index
    %c0_6 = arith.constant 0 : index
    %c0_7 = arith.constant 0 : index
    %4 = vector.load %arg3[%c0_5, %c0_6, %c0_7] : memref<1x8x4xf32, #tpu.memory_space<vmem>>, vector<1x8x4xf32>
    %5 = vector.shape_cast %4 : vector<1x8x4xf32> to vector<8x4xf32>
    %6 = tpu.iota {dimensions = array<i32: 0>} : vector<9x4xi32>
    %7 = vector.shape_cast %1 : vector<8x4xi32> to vector<8x1x4xi32>
    %8 = vector.shape_cast %6 : vector<9x4xi32> to vector<1x9x4xi32>
    %9 = vector.broadcast %7 : vector<8x1x4xi32> to vector<8x9x4xi32>
    %10 = vector.broadcast %8 : vector<1x9x4xi32> to vector<8x9x4xi32>
    %11 = arith.cmpi eq, %9, %10 : vector<8x9x4xi32>
    %12 = vector.shape_cast %5 : vector<8x4xf32> to vector<8x1x4xf32>
    %cst = arith.constant 0.000000e+00 : f32
    %13 = vector.shape_cast %12 : vector<8x1x4xf32> to vector<8x1x4xf32>
    %14 = vector.broadcast %13 : vector<8x1x4xf32> to vector<8x9x4xf32>
    %15 = vector.broadcast %cst : f32 to vector<8x9x4xf32>
    %16 = arith.select %11, %14, %15 : vector<8x9x4xi1>, vector<8x9x4xf32>
    %cst_8 = arith.constant dense<0.000000e+00> : vector<8x9xf32>
    %17 = vector.multi_reduction <add>, %16, %cst_8 [2] : vector<8x9x4xf32> to vector<8x9xf32>
    %cst_9 = arith.constant 2.500000e-01 : f32
    %18 = vector.broadcast %cst_9 : f32 to vector<8x9xf32>
    %19 = arith.mulf %17, %18 : vector<8x9xf32>
    %20 = tpu.iota {dimensions = array<i32: 0>} : vector<9x4xi32>
    %21 = vector.shape_cast %3 : vector<8x4xi32> to vector<8x1x4xi32>
    %22 = vector.shape_cast %20 : vector<9x4xi32> to vector<1x9x4xi32>
    %23 = vector.broadcast %21 : vector<8x1x4xi32> to vector<8x9x4xi32>
    %24 = vector.broadcast %22 : vector<1x9x4xi32> to vector<8x9x4xi32>
    %25 = arith.cmpi eq, %23, %24 : vector<8x9x4xi32>
    %26 = vector.shape_cast %5 : vector<8x4xf32> to vector<8x1x4xf32>
    %cst_10 = arith.constant 0.000000e+00 : f32
    %27 = vector.shape_cast %26 : vector<8x1x4xf32> to vector<8x1x4xf32>
    %28 = vector.broadcast %27 : vector<8x1x4xf32> to vector<8x9x4xf32>
    %29 = vector.broadcast %cst_10 : f32 to vector<8x9x4xf32>
    %30 = arith.select %25, %28, %29 : vector<8x9x4xi1>, vector<8x9x4xf32>
    %cst_11 = arith.constant dense<0.000000e+00> : vector<8x9xf32>
    %31 = vector.multi_reduction <add>, %30, %cst_11 [2] : vector<8x9x4xf32> to vector<8x9xf32>
    %cst_12 = arith.constant 2.500000e-01 : f32
    %32 = vector.broadcast %cst_12 : f32 to vector<8x9xf32>
    %33 = arith.mulf %31, %32 : vector<8x9xf32>
    %c0_13 = arith.constant 0 : index
    %c0_14 = arith.constant 0 : index
    %c0_15 = arith.constant 0 : index
    %34 = vector.load %arg4[%c0_13, %c0_14, %c0_15] : memref<1x9x128xf32, #tpu.memory_space<vmem>>, vector<1x9x128xf32>
    %35 = vector.shape_cast %34 : vector<1x9x128xf32> to vector<9x128xf32>
    %cst_16 = arith.constant dense<0.000000e+00> : vector<8x128xf32>
    %36 = tpu.matmul %19, %35, %cst_16 {dimension_numbers = #tpu.dot_dimension_numbers<[1], [0], [0], [1], [0, 0, 1, 1], [], []>, precision = #tpu.contract_precision<fp32>} : vector<8x9xf32>, vector<9x128xf32>, vector<8x128xf32> -> vector<8x128xf32>
    %c0_17 = arith.constant 0 : index
    %c0_18 = arith.constant 0 : index
    %37 = vector.load %arg5[%c0_17, %c0_18] : memref<9x128xf32, #tpu.memory_space<vmem>>, vector<9x128xf32>
    %cst_19 = arith.constant dense<0.000000e+00> : vector<8x128xf32>
    %38 = tpu.matmul %33, %37, %cst_19 {dimension_numbers = #tpu.dot_dimension_numbers<[1], [0], [0], [1], [0, 0, 1, 1], [], []>, precision = #tpu.contract_precision<fp32>} : vector<8x9xf32>, vector<9x128xf32>, vector<8x128xf32> -> vector<8x128xf32>
    %39 = arith.addf %36, %38 : vector<8x128xf32>
    %c0_20 = arith.constant 0 : index
    %c0_21 = arith.constant 0 : index
    %40 = vector.load %arg6[%c0_20, %c0_21] : memref<128x128xf32, #tpu.memory_space<vmem>>, vector<128x128xf32>
    %cst_22 = arith.constant dense<0.000000e+00> : vector<8x128xf32>
    %41 = tpu.matmul %39, %40, %cst_22 {dimension_numbers = #tpu.dot_dimension_numbers<[1], [0], [0], [1], [0, 0, 1, 1], [], []>, precision = #tpu.contract_precision<fp32>} : vector<8x128xf32>, vector<128x128xf32>, vector<8x128xf32> -> vector<8x128xf32>
    %c0_23 = arith.constant 0 : index
    %c0_24 = arith.constant 0 : index
    %c0_25 = arith.constant 0 : index
    %42 = vector.load %arg7[%c0_23, %c0_24, %c0_25] : memref<1x8x128xf32, #tpu.memory_space<vmem>>, vector<1x8x128xf32>
    %43 = vector.shape_cast %42 : vector<1x8x128xf32> to vector<8x128xf32>
    %44 = vector.shape_cast %41 : vector<8x128xf32> to vector<1x8x128xf32>
    tpu.vector_store %arg7[%c0_23, %c0_24, %c0_25], %44 {strides = array<i32>} : memref<1x8x128xf32, #tpu.memory_space<vmem>>, vector<1x8x128xf32>,
    return
  }
  func.func @transform_0(%arg0: i32) -> (i32, i32, i32) {
    %c0_i32 = arith.constant 0 : i32
    %c0_i32_0 = arith.constant 0 : i32
    %c0_i32_1 = arith.constant 0 : i32
    return %arg0, %c0_i32, %c0_i32_0 : i32, i32, i32
  }
  func.func @transform_1(%arg0: i32) -> (i32, i32, i32) {
    %c0_i32 = arith.constant 0 : i32
    %c0_i32_0 = arith.constant 0 : i32
    %c0_i32_1 = arith.constant 0 : i32
    return %arg0, %c0_i32, %c0_i32_0 : i32, i32, i32
  }
  func.func @transform_2(%arg0: i32) -> (i32, i32, i32) {
    %c0_i32 = arith.constant 0 : i32
    %c0_i32_0 = arith.constant 0 : i32
    %c0_i32_1 = arith.constant 0 : i32
    return %arg0, %c0_i32, %c0_i32_0 : i32, i32, i32
  }
  func.func @transform_3(%arg0: i32) -> (i32, i32, i32) {
    %c0_i32 = arith.constant 0 : i32
    %c0_i32_0 = arith.constant 0 : i32
    %c0_i32_1 = arith.constant 0 : i32
    return %arg0, %c0_i32, %c0_i32_0 : i32, i32, i32
  }
  func.func @transform_4(%arg0: i32) -> (i32, i32) {
    %c0_i32 = arith.constant 0 : i32
    %c0_i32_0 = arith.constant 0 : i32
    %c0_i32_1 = arith.constant 0 : i32
    return %c0_i32, %c0_i32_0 : i32, i32
  }
  func.func @transform_5(%arg0: i32) -> (i32, i32) {
    %c0_i32 = arith.constant 0 : i32
    %c0_i32_0 = arith.constant 0 : i32
    %c0_i32_1 = arith.constant 0 : i32
    return %c0_i32, %c0_i32_0 : i32, i32
  }
  func.func @transform_6(%arg0: i32) -> (i32, i32, i32) {
    %c0_i32 = arith.constant 0 : i32
    %c0_i32_0 = arith.constant 0 : i32
    %c0_i32_1 = arith.constant 0 : i32
    return %arg0, %c0_i32, %c0_i32_0 : i32, i32, i32
  }
}

</mosaic_0001>

<llo_original>
// kernel: tpu_custom_call.1
$region0: #{tpu_custom_call.1}
  #allocation0 [shape = 'u32[]', space=smem, size = 0x4, offset = 0x4, fixed_abs, tag = 'smem constant byte address 0x4 - core index']
  #allocation1 [shape = 'u32[144,128]{1,0:T(1,128)}', space=vmem, size = 0x12000, scoped, tag = 'internal scratch']
  %s0 = inlined_call_operand.vmem [shape: s32[2,8,4], index: 0, kind: input, shape index: {}]
  %s1 = inlined_call_operand.vmem [shape: s32[2,8,4], index: 1, kind: input, shape index: {}]
  %s2 = inlined_call_operand.vmem [shape: f32[2,8,4], index: 2, kind: input, shape index: {}]
  %s3 = inlined_call_operand.vmem [shape: f32[2,9,128], index: 3, kind: input, shape index: {}]
  %s4 = inlined_call_operand.hbm [shape: f32[9,128], index: 4, kind: input, shape index: {}]
  %s5 = inlined_call_operand.vmem [shape: f32[128,128], index: 5, kind: input, shape index: {}]
  %s6 = inlined_call_operand.hbm [shape: f32[2,8,128], index: 6, kind: output, shape index: {}]
  %s7 = sld [smem:[#allocation0]]
  $region61: #{tpu_custom_call.1} parent=0
    _
  %s9 = ssub.s32 1, %s7
  %s10 = scalar_select 0, %s9, %s7
  $region1: #{tpu_custom_call.1} parent=0
    #allocation2 [shape = 'u8[8192]{0}', space=vmem, size = 0x2000, scoped, tag = 'input window, operand 4, single buffered']
    #allocation3 [shape = 's32[2]{0}', space=sflag, size = 0x8, scoped, tag = 'scoped memory for tpu_custom_call.1']
    #allocation4 [shape = 's32[2]{0}', space=sflag, size = 0x8, scoped, tag = 'scoped memory for tpu_custom_call.1']
    #allocation5 [shape = 'u8[8192]{0}', space=vmem, size = 0x2000, scoped, tag = 'output window, operand 0']
    %11 = vsyncpa [#allocation3], 0
    %12 = vsyncpa [#allocation4], 0
    %s13 = scalar_lea.sflag [#allocation4], 1
    %14 = vsyncpa %s13, 0
    loop: start=0, step=1, limit=4
    $region2: #{tpu_custom_call.1} parent=1 // loop_pre_header
      _
    $region3: #{tpu_custom_call.1} parent=1 // loop_header
      %s16 = sphi 0, %s20
      %p17 = scmp.ge.s32.totalorder %s16, 4
      %s26 = sphi 0, %s28
      %s29 = sphi 0, %s26
      %s30 = sphi 0, %s29
      %s46 = sphi 0, %s30
      %s52 = sphi 0, %s54
      %s55 = sphi 0, %s52
      %s56 = sphi 0, %s55
      %s72 = sphi 0, %s56
      %s78 = sphi 0, %s80
      %s81 = sphi 0, %s78
      %s82 = sphi 0, %s81
      %s98 = sphi 0, %s82
      %s104 = sphi 0, %s106
      %s107 = sphi 0, %s104
      %s108 = sphi 0, %s107
      %s124 = sphi 0, %s108
      %s128 = sphi 0, %s128
      %s130 = sphi 0, %s128
      %s131 = sphi 0, %s130
      %s145 = sphi 0, %s131
      %s149 = sphi 0, %s149
      %s151 = sphi 0, %s149
      %s152 = sphi 0, %s151
      %s166 = sphi 0, %s152
      %s172 = sphi 0, %s174
      %s175 = sphi 0, %s172
      %s176 = sphi 0, %s175
      %s192 = sphi 0, %s176
    $region4: #{tpu_custom_call.1} parent=1 // loop_header_branch
      %19 = sbr.rel (%p17) target = $region8
    $region5: #{tpu_custom_call.1} parent=1 // loop_body
      %s21 = ssub.s32 %s16, 1
      %s22 = ssub.s32 %s16, 2
      %s23 = sadd.s32 %s16, 1
      %s24 = ssub.s32 %s16, %s23
      %p25 = scmp.eq.s32.totalorder %s24, 0
      %s27 = sadd.s32 %s26, 1
      %s28 = scalar_select %p25, %s26, %s27
      %p31 = pneg %p25
      %p32 = scmp.eq.s32.totalorder %s16, 1
      %p33 = por %p31, %p32
      %p34 = scmp.ne.s32.totalorder %s26, %s29
      %p35 = scmp.eq.s32.totalorder %s16, 0
      %p36 = por %p34, %p35
      %p37 = scmp.ne.s32.totalorder %s26, %s29
      %p38 = scmp.eq.s32.totalorder %s21, 1
      %p39 = por %p37, %p38
      %p40 = scmp.ne.s32.totalorder %s29, %s30
      %p41 = scmp.eq.s32.totalorder %s21, 0
      %p42 = por %p40, %p41
      %p43 = scmp.ne.s32.totalorder %s29, %s30
      %p44 = scmp.eq.s32.totalorder %s22, 1
      %p45 = por %p43, %p44
      %p47 = scmp.ne.s32.totalorder %s30, %s46
      %p48 = scmp.eq.s32.totalorder %s22, 0
      %p49 = por %p47, %p48
      %s50 = ssub.s32 %s16, %s23
      %p51 = scmp.eq.s32.totalorder %s50, 0
      %s53 = sadd.s32 %s52, 1
      %s54 = scalar_select %p51, %s52, %s53
      %p57 = pneg %p51
      %p58 = scmp.eq.s32.totalorder %s16, 1
      %p59 = por %p57, %p58
      %p60 = scmp.ne.s32.totalorder %s52, %s55
      %p61 = scmp.eq.s32.totalorder %s16, 0
      %p62 = por %p60, %p61
      %p63 = scmp.ne.s32.totalorder %s52, %s55
      %p64 = scmp.eq.s32.totalorder %s21, 1
      %p65 = por %p63, %p64
      %p66 = scmp.ne.s32.totalorder %s55, %s56
      %p67 = scmp.eq.s32.totalorder %s21, 0
      %p68 = por %p66, %p67
      %p69 = scmp.ne.s32.totalorder %s55, %s56
      %p70 = scmp.eq.s32.totalorder %s22, 1
      %p71 = por %p69, %p70
      %p73 = scmp.ne.s32.totalorder %s56, %s72
      %p74 = scmp.eq.s32.totalorder %s22, 0
      %p75 = por %p73, %p74
      %s76 = ssub.s32 %s16, %s23
      %p77 = scmp.eq.s32.totalorder %s76, 0
      %s79 = sadd.s32 %s78, 1
      %s80 = scalar_select %p77, %s78, %s79
      %p83 = pneg %p77
      %p84 = scmp.eq.s32.totalorder %s16, 1
      %p85 = por %p83, %p84
      %p86 = scmp.ne.s32.totalorder %s78, %s81
      %p87 = scmp.eq.s32.totalorder %s16, 0
      %p88 = por %p86, %p87
      %p89 = scmp.ne.s32.totalorder %s78, %s81
      %p90 = scmp.eq.s32.totalorder %s21, 1
      %p91 = por %p89, %p90
      %p92 = scmp.ne.s32.totalorder %s81, %s82
      %p93 = scmp.eq.s32.totalorder %s21, 0
      %p94 = por %p92, %p93
      %p95 = scmp.ne.s32.totalorder %s81, %s82
      %p96 = scmp.eq.s32.totalorder %s22, 1
      %p97 = por %p95, %p96
      %p99 = scmp.ne.s32.totalorder %s82, %s98
      %p100 = scmp.eq.s32.totalorder %s22, 0
      %p101 = por %p99, %p100
      %s102 = ssub.s32 %s16, %s23
      %p103 = scmp.eq.s32.totalorder %s102, 0
      %s105 = sadd.s32 %s104, 1
      %s106 = scalar_select %p103, %s104, %s105
      %p109 = pneg %p103
      %p110 = scmp.eq.s32.totalorder %s16, 1
      %p111 = por %p109, %p110
      %p112 = scmp.ne.s32.totalorder %s104, %s107
      %p113 = scmp.eq.s32.totalorder %s16, 0
      %p114 = por %p112, %p113
      %p115 = scmp.ne.s32.totalorder %s104, %s107
      %p116 = scmp.eq.s32.totalorder %s21, 1
      %p117 = por %p115, %p116
      %p118 = scmp.ne.s32.totalorder %s107, %s108
      %p119 = scmp.eq.s32.totalorder %s21, 0
      %p120 = por %p118, %p119
      %p121 = scmp.ne.s32.totalorder %s107, %s108
      %p122 = scmp.eq.s32.totalorder %s22, 1
      %p123 = por %p121, %p122
      %p125 = scmp.ne.s32.totalorder %s108, %s124
      %p126 = scmp.eq.s32.totalorder %s22, 0
      %p127 = por %p125, %p126
      %s129 = sadd.s32 %s128, 1
      %p132 = scmp.eq.s32.totalorder %s16, 1
      %p133 = scmp.ne.s32.totalorder %s128, %s130
      %p134 = scmp.eq.s32.totalorder %s16, 0
      %p135 = por %p133, %p134
      %p136 = scmp.ne.s32.totalorder %s128, %s130
      %p137 = scmp.eq.s32.totalorder %s21, 1
      %p138 = por %p136, %p137
      %p139 = scmp.ne.s32.totalorder %s130, %s131
      %p140 = scmp.eq.s32.totalorder %s21, 0
      %p141 = por %p139, %p140
      %p142 = scmp.ne.s32.totalorder %s130, %s131
      %p143 = scmp.eq.s32.totalorder %s22, 1
      %p144 = por %p142, %p143
      %p146 = scmp.ne.s32.totalorder %s131, %s145
      %p147 = scmp.eq.s32.totalorder %s22, 0
      %p148 = por %p146, %p147
      %s150 = sadd.s32 %s149, 1
      %p153 = scmp.eq.s32.totalorder %s16, 1
      %p154 = scmp.ne.s32.totalorder %s149, %s151
      %p155 = scmp.eq.s32.totalorder %s16, 0
      %p156 = por %p154, %p155
      %p157 = scmp.ne.s32.totalorder %s149, %s151
      %p158 = scmp.eq.s32.totalorder %s21, 1
      %p159 = por %p157, %p158
      %p160 = scmp.ne.s32.totalorder %s151, %s152
      %p161 = scmp.eq.s32.totalorder %s21, 0
      %p162 = por %p160, %p161
      %p163 = scmp.ne.s32.totalorder %s151, %s152
      %p164 = scmp.eq.s32.totalorder %s22, 1
      %p165 = por %p163, %p164
      %p167 = scmp.ne.s32.totalorder %s152, %s166
      %p168 = scmp.eq.s32.totalorder %s22, 0
      %p169 = por %p167, %p168
      %s170 = ssub.s32 %s16, %s23
      %p171 = scmp.eq.s32.totalorder %s170, 0
      %s173 = sadd.s32 %s172, 1
      %s174 = scalar_select %p171, %s172, %s173
      %p177 = pneg %p171
      %p178 = scmp.eq.s32.totalorder %s16, 1
      %p179 = por %p177, %p178
      %p180 = scmp.ne.s32.totalorder %s172, %s175
      %p181 = scmp.eq.s32.totalorder %s16, 0
      %p182 = por %p180, %p181
      %p183 = scmp.ne.s32.totalorder %s172, %s175
      %p184 = scmp.eq.s32.totalorder %s21, 1
      %p185 = por %p183, %p184
      %p186 = scmp.ne.s32.totalorder %s175, %s176
      %p187 = scmp.eq.s32.totalorder %s21, 0
      %p188 = por %p186, %p187
      %p189 = scmp.ne.s32.totalorder %s175, %s176
      %p190 = scmp.eq.s32.totalorder %s22, 1
      %p191 = por %p189, %p190
      %p193 = scmp.ne.s32.totalorder %s176, %s192
      %p194 = scmp.eq.s32.totalorder %s22, 0
      %p195 = por %p193, %p194
      %p196 = scmp.le.s32.totalorder 1, %s16
      %p197 = scmp.lt.s32.totalorder %s16, 3
      %p198 = pnand %p196, %p197
      %p199 = pneg %p198
      // Predicated region
      $region9: #{tpu_custom_call.1} parent=5 // pred_check
        _
      $region10: #{tpu_custom_call.1} parent=5 // pred_check_branch
        %201 = sbr.rel (%p198) target = $region12
      $region11: #{tpu_custom_call.1} parent=5 // pred_region
        %s202 = ssub.s32 %s16, 1
        // Predicated region
        $region13: #{tpu_custom_call.1} parent=11 // pred_check
          %p203 = pneg %p141
        $region14: #{tpu_custom_call.1} parent=11 // pred_check_branch
          %205 = sbr.rel (%p203) target = $region16
        $region15: #{tpu_custom_call.1} parent=11 // pred_region
          %s207 = ssub.s32 256, 256
          %208 = vsyncadd [#allocation3], %s207
          %s209 = sshll.u32 [#allocation2], 4
          %s210 = int_to_ptr.vmem [resolvable:$true] %s209
          %215 = dma.hbm_to_vmem [thread:$0]  %s4, 256, %s210, [#allocation3], 128, 128, 8
        $region16: #{tpu_custom_call.1} parent=11 // pred_fallthru
          _
        // Predicated region
        $region17: #{tpu_custom_call.1} parent=11 // pred_check
          %p216 = pneg %p162
        $region18: #{tpu_custom_call.1} parent=11 // pred_check_branch
          %218 = sbr.rel (%p216) target = $region20
        $region19: #{tpu_custom_call.1} parent=11 // pred_region
          _
        $region20: #{tpu_custom_call.1} parent=11 // pred_fallthru
          _
      $region12: #{tpu_custom_call.1} parent=5 // pred_fallthru
        _
      %p219 = scmp.lt.s32.totalorder %s16, 2
      // Predicated region
      $region21: #{tpu_custom_call.1} parent=5 // pred_check
        %p220 = pneg %p219
      $region22: #{tpu_custom_call.1} parent=5 // pred_check_branch
        %222 = sbr.rel (%p220) target = $region24
      $region23: #{tpu_custom_call.1} parent=5 // pred_region
        // Predicated region
        $region25: #{tpu_custom_call.1} parent=23 // pred_check
          %p223 = pneg %p36
        $region26: #{tpu_custom_call.1} parent=23 // pred_check_branch
          %225 = sbr.rel (%p223) target = $region28
        $region27: #{tpu_custom_call.1} parent=23 // pred_region
          %p226 = scmp.lt.s32.totalorder %s16, 1
          %s227 = scalar_select %p226, %s16, 1
          %s228 = smul.addr %s227, 8
          %s229 = scalar_lea.vmem %s0, %s228
        $region28: #{tpu_custom_call.1} parent=23 // pred_fallthru
          _
        // Predicated region
        $region29: #{tpu_custom_call.1} parent=23 // pred_check
          %p230 = pneg %p62
        $region30: #{tpu_custom_call.1} parent=23 // pred_check_branch
          %232 = sbr.rel (%p230) target = $region32
        $region31: #{tpu_custom_call.1} parent=23 // pred_region
          %p233 = scmp.lt.s32.totalorder %s16, 1
          %s234 = scalar_select %p233, %s16, 1
          %s235 = smul.addr %s234, 8
          %s236 = scalar_lea.vmem %s1, %s235
        $region32: #{tpu_custom_call.1} parent=23 // pred_fallthru
          _
        // Predicated region
        $region33: #{tpu_custom_call.1} parent=23 // pred_check
          %p237 = pneg %p88
        $region34: #{tpu_custom_call.1} parent=23 // pred_check_branch
          %239 = sbr.rel (%p237) target = $region36
        $region35: #{tpu_custom_call.1} parent=23 // pred_region
          %p240 = scmp.lt.s32.totalorder %s16, 1
          %s241 = scalar_select %p240, %s16, 1
          %s242 = smul.addr %s241, 8
          %s243 = scalar_lea.vmem %s2, %s242
        $region36: #{tpu_custom_call.1} parent=23 // pred_fallthru
          _
        // Predicated region
        $region37: #{tpu_custom_call.1} parent=23 // pred_check
          %p244 = pneg %p114
        $region38: #{tpu_custom_call.1} parent=23 // pred_check_branch
          %246 = sbr.rel (%p244) target = $region40
        $region39: #{tpu_custom_call.1} parent=23 // pred_region
          %p247 = scmp.lt.s32.totalorder %s16, 1
          %s248 = scalar_select %p247, %s16, 1
          %s249 = smul.addr %s248, 2
          %s250 = smul.addr %s249, 8
          %s251 = scalar_lea.vmem %s3, %s250
        $region40: #{tpu_custom_call.1} parent=23 // pred_fallthru
          _
      $region24: #{tpu_custom_call.1} parent=5 // pred_fallthru
        _
      %p252 = scmp.le.s32.totalorder 1, %s16
      %p253 = scmp.lt.s32.totalorder %s16, 3
      %p254 = pnand %p252, %p253
      %p255 = pneg %p254
      // Predicated region
      $region41: #{tpu_custom_call.1} parent=5 // pred_check
        _
      $region42: #{tpu_custom_call.1} parent=5 // pred_check_branch
        %257 = sbr.rel (%p254) target = $region44
      $region43: #{tpu_custom_call.1} parent=5 // pred_region
        %s258 = ssub.s32 %s16, 1
        // Predicated region
        $region45: #{tpu_custom_call.1} parent=43 // pred_check
          %p259 = pneg %p141
        $region46: #{tpu_custom_call.1} parent=43 // pred_check_branch
          %261 = sbr.rel (%p259) target = $region48
        $region47: #{tpu_custom_call.1} parent=43 // pred_region
          %262 = dma.done [#allocation3], 256
        $region48: #{tpu_custom_call.1} parent=43 // pred_fallthru
          _
        %p263 = scmp.lt.s32.totalorder %s21, 1
        %s264 = scalar_select %p263, %s21, 1
        %s265 = smul.addr %s264, 8
        %s266 = scalar_lea.vmem %s0, %s265
        %p267 = pneg %p42
        %p268 = pneg %p39
        %p269 = scmp.lt.s32.totalorder %s21, 1
        %s270 = scalar_select %p269, %s21, 1
        %s271 = smul.addr %s270, 8
        %s272 = scalar_lea.vmem %s1, %s271
        %p273 = pneg %p68
        %p274 = pneg %p65
        %p275 = scmp.lt.s32.totalorder %s21, 1
        %s276 = scalar_select %p275, %s21, 1
        %s277 = smul.addr %s276, 8
        %s278 = scalar_lea.vmem %s2, %s277
        %p279 = pneg %p94
        %p280 = pneg %p91
        %p281 = scmp.lt.s32.totalorder %s21, 1
        %s282 = scalar_select %p281, %s21, 1
        %s283 = smul.addr %s282, 2
        %s284 = smul.addr %s283, 8
        %s285 = scalar_lea.vmem %s3, %s284
        %p286 = pneg %p120
        %p287 = pneg %p117
        %p288 = pneg %p141
        %p289 = pneg %p138
        %p290 = pneg %p162
        %p291 = pneg %p159
        %p292 = pneg %p188
        %p293 = pneg %p185
        %s294 = sand.u32 %s175, 1
        %s295 = scalar_lea.sflag [#allocation4], %s294
        %s296 = sand.u32 %s175, 1
        %s297 = smul.addr %s296, 8
        %s298 = scalar_lea.vmem [#allocation5], %s297
        %p299 = scmp.lt.s32.totalorder %s21, 1
        %s300 = scalar_select %p299, %s21, 1
        %s301 = smul.addr %s300, 8
        %s302 = scalar_lea.vmem %s0, %s301
        %p303 = scmp.lt.s32.totalorder %s21, 1
        %s304 = scalar_select %p303, %s21, 1
        %s305 = smul.addr %s304, 8
        %s306 = scalar_lea.vmem %s1, %s305
        %p307 = scmp.lt.s32.totalorder %s21, 1
        %s308 = scalar_select %p307, %s21, 1
        %s309 = smul.addr %s308, 8
        %s310 = scalar_lea.vmem %s2, %s309
        %p311 = scmp.lt.s32.totalorder %s21, 1
        %s312 = scalar_select %p311, %s21, 1
        %s313 = smul.addr %s312, 2
        %s314 = smul.addr %s313, 8
        %s315 = scalar_lea.vmem %s3, %s314
        %v316 = vld [vmem:[%s302] sm:$0xff]
        %v317 = vld [vmem:[%s306] sm:$0xff]
        %v318 = vld [vmem:[%s310] sm:$0xff]
        %v319 = vlaneseq
        %v320 = vshrl.u32 %v319, 7
        %v321 = vadd.s32 %v320, 8
        %v322 = vcombine.high %v316, %v316
        %v324 = vunpack.c.l.s4 1966171168
        %v325 = vunpack.c.0.s8 %v324
        %v326 = vlaneseq
        %v327 = vshrl.u32 %v326, 7
        %v328 = vsub.s32 %v325, %v327
        %v329 = vrot.slane %v316, %v328
        %v331 = vunpack.c.l.s4 1966171168
        %v332 = vunpack.c.0.s8 %v331
        %v333 = vlaneseq
        %v334 = vshrl.u32 %v333, 7
        %v335 = vsub.s32 %v332, %v334
        %v336 = vrot.slane %v322, %v335
        %v337 = vcombine.high %v329, %v329
        %v338 = vcombine.high %v336, %v336
        %v340 = vunpack.c.l.s4 1966171168
        %v341 = vunpack.c.0.s8 %v340
        %v342 = vlaneseq
        %v343 = vshrl.u32 %v342, 7
        %v344 = vsub.s32 %v341, %v343
        %v345 = vrot.slane %v329, %v344
        %v347 = vunpack.c.l.s4 1966171168
        %v348 = vunpack.c.0.s8 %v347
        %v349 = vlaneseq
        %v350 = vshrl.u32 %v349, 7
        %v351 = vsub.s32 %v348, %v350
        %v352 = vrot.slane %v336, %v351
        %v354 = vunpack.c.l.s4 1966171168
        %v355 = vunpack.c.0.s8 %v354
        %v356 = vlaneseq
        %v357 = vshrl.u32 %v356, 7
        %v358 = vsub.s32 %v355, %v357
        %v359 = vrot.slane %v337, %v358
        %v361 = vunpack.c.l.s4 1966171168
        %v362 = vunpack.c.0.s8 %v361
        %v363 = vlaneseq
        %v364 = vshrl.u32 %v363, 7
        %v365 = vsub.s32 %v362, %v364
        %v366 = vrot.slane %v338, %v365
        %v367 = vcombine.high %v345, %v345
        %v368 = vcombine.high %v352, %v352
        %v369 = vcombine.high %v359, %v359
        %v370 = vcombine.high %v366, %v366
        %v371 = vlaneseq
        %v372 = vshrl.u32 %v371, 7
        %v373 = vsub.s32 0, %v372
        %v374 = vrot.slane %v345, %v373
        %v375 = vlaneseq
        %v376 = vshrl.u32 %v375, 7
        %v377 = vsub.s32 0, %v376
        %v378 = vrot.slane %v359, %v377
        %v379 = vlaneseq
        %v380 = vshrl.u32 %v379, 7
        %v381 = vsub.s32 0, %v380
        %v382 = vrot.slane %v367, %v381
        %v383 = vlaneseq
        %v384 = vshrl.u32 %v383, 7
        %v385 = vsub.s32 0, %v384
        %v386 = vrot.slane %v369, %v385
        %v387 = vlaneseq
        %v388 = vshrl.u32 %v387, 7
        %v389 = vsub.s32 0, %v388
        %v390 = vrot.slane %v352, %v389
        %v391 = vlaneseq
        %v392 = vshrl.u32 %v391, 7
        %v393 = vsub.s32 0, %v392
        %v394 = vrot.slane %v366, %v393
        %v395 = vlaneseq
        %v396 = vshrl.u32 %v395, 7
        %v397 = vsub.s32 0, %v396
        %v398 = vrot.slane %v368, %v397
        %v399 = vlaneseq
        %v400 = vshrl.u32 %v399, 7
        %v401 = vsub.s32 0, %v400
        %v402 = vrot.slane %v370, %v401
        %vm403 = vcmp.eq.s32.totalorder %v374, %v320
        %vm404 = vcmp.eq.s32.totalorder %v374, %v321
        %vm405 = vcmp.eq.s32.totalorder %v378, %v320
        %vm406 = vcmp.eq.s32.totalorder %v378, %v321
        %vm407 = vcmp.eq.s32.totalorder %v382, %v320
        %vm408 = vcmp.eq.s32.totalorder %v382, %v321
        %vm409 = vcmp.eq.s32.totalorder %v386, %v320
        %vm410 = vcmp.eq.s32.totalorder %v386, %v321
        %vm411 = vcmp.eq.s32.totalorder %v390, %v320
        %vm412 = vcmp.eq.s32.totalorder %v390, %v321
        %vm413 = vcmp.eq.s32.totalorder %v394, %v320
        %vm414 = vcmp.eq.s32.totalorder %v394, %v321
        %vm415 = vcmp.eq.s32.totalorder %v398, %v320
        %vm416 = vcmp.eq.s32.totalorder %v398, %v321
        %vm417 = vcmp.eq.s32.totalorder %v402, %v320
        %vm418 = vcmp.eq.s32.totalorder %v402, %v321
        %v420 = vcombine.high %v318, %v318
        %v422 = vunpack.c.l.s4 1966171168
        %v423 = vunpack.c.0.s8 %v422
        %v424 = vlaneseq
        %v425 = vshrl.u32 %v424, 7
        %v426 = vsub.s32 %v423, %v425
        %v427 = vrot.slane %v318, %v426
        %v429 = vunpack.c.l.s4 1966171168
        %v430 = vunpack.c.0.s8 %v429
        %v431 = vlaneseq
        %v432 = vshrl.u32 %v431, 7
        %v433 = vsub.s32 %v430, %v432
        %v434 = vrot.slane %v420, %v433
        %v435 = vcombine.high %v427, %v427
        %v436 = vcombine.high %v434, %v434
        %v438 = vunpack.c.l.s4 1966171168
        %v439 = vunpack.c.0.s8 %v438
        %v440 = vlaneseq
        %v441 = vshrl.u32 %v440, 7
        %v442 = vsub.s32 %v439, %v441
        %v443 = vrot.slane %v427, %v442
        %v445 = vunpack.c.l.s4 1966171168
        %v446 = vunpack.c.0.s8 %v445
        %v447 = vlaneseq
        %v448 = vshrl.u32 %v447, 7
        %v449 = vsub.s32 %v446, %v448
        %v450 = vrot.slane %v434, %v449
        %v452 = vunpack.c.l.s4 1966171168
        %v453 = vunpack.c.0.s8 %v452
        %v454 = vlaneseq
        %v455 = vshrl.u32 %v454, 7
        %v456 = vsub.s32 %v453, %v455
        %v457 = vrot.slane %v435, %v456
        %v459 = vunpack.c.l.s4 1966171168
        %v460 = vunpack.c.0.s8 %v459
        %v461 = vlaneseq
        %v462 = vshrl.u32 %v461, 7
        %v463 = vsub.s32 %v460, %v462
        %v464 = vrot.slane %v436, %v463
        %v465 = vcombine.high %v443, %v443
        %v466 = vcombine.high %v450, %v450
        %v467 = vcombine.high %v457, %v457
        %v468 = vcombine.high %v464, %v464
        %v469 = vlaneseq
        %v470 = vshrl.u32 %v469, 7
        %v471 = vsub.s32 0, %v470
        %v472 = vrot.slane %v443, %v471
        %v473 = vlaneseq
        %v474 = vshrl.u32 %v473, 7
        %v475 = vsub.s32 0, %v474
        %v476 = vrot.slane %v457, %v475
        %v477 = vlaneseq
        %v478 = vshrl.u32 %v477, 7
        %v479 = vsub.s32 0, %v478
        %v480 = vrot.slane %v465, %v479
        %v481 = vlaneseq
        %v482 = vshrl.u32 %v481, 7
        %v483 = vsub.s32 0, %v482
        %v484 = vrot.slane %v467, %v483
        %v485 = vlaneseq
        %v486 = vshrl.u32 %v485, 7
        %v487 = vsub.s32 0, %v486
        %v488 = vrot.slane %v450, %v487
        %v489 = vlaneseq
        %v490 = vshrl.u32 %v489, 7
        %v491 = vsub.s32 0, %v490
        %v492 = vrot.slane %v464, %v491
        %v493 = vlaneseq
        %v494 = vshrl.u32 %v493, 7
        %v495 = vsub.s32 0, %v494
        %v496 = vrot.slane %v466, %v495
        %v497 = vlaneseq
        %v498 = vshrl.u32 %v497, 7
        %v499 = vsub.s32 0, %v498
        %v500 = vrot.slane %v468, %v499
        %v509 = vsel %vm403, %v472, 0.0
        %v510 = vsel %vm404, %v472, 0.0
        %v511 = vsel %vm405, %v476, 0.0
        %v512 = vsel %vm406, %v476, 0.0
        %v513 = vsel %vm407, %v480, 0.0
        %v514 = vsel %vm408, %v480, 0.0
        %v515 = vsel %vm409, %v484, 0.0
        %v516 = vsel %vm410, %v484, 0.0
        %v517 = vsel %vm411, %v488, 0.0
        %v518 = vsel %vm412, %v488, 0.0
        %v519 = vsel %vm413, %v492, 0.0
        %v520 = vsel %vm414, %v492, 0.0
        %v521 = vsel %vm415, %v496, 0.0
        %v522 = vsel %vm416, %v496, 0.0
        %v523 = vsel %vm417, %v500, 0.0
        %v524 = vsel %vm418, %v500, 0.0
        %vm525 = vcmask 31744
        %v526 = vsel %vm525, %v509, 0.0
        %527 = vadd.xlane.f32.xlu0 %v526
        %v528 = vpop.xlane.xlu0 %527
        %vm529 = vcmask 24576
        %v530 = vsel %vm529, %v510, 0.0
        %531 = vadd.xlane.f32.xlu0 %v530
        %v532 = vpop.xlane.xlu0 %531
        %v533 = vsel %vm525, %v511, 0.0
        %534 = vadd.xlane.f32.xlu0 %v533
        %v535 = vpop.xlane.xlu0 %534
        %v536 = vsel %vm529, %v512, 0.0
        %537 = vadd.xlane.f32.xlu0 %v536
        %v538 = vpop.xlane.xlu0 %537
        %v539 = vsel %vm525, %v513, 0.0
        %540 = vadd.xlane.f32.xlu0 %v539
        %v541 = vpop.xlane.xlu0 %540
        %v542 = vsel %vm529, %v514, 0.0
        %543 = vadd.xlane.f32.xlu0 %v542
        %v544 = vpop.xlane.xlu0 %543
        %v545 = vsel %vm525, %v515, 0.0
        %546 = vadd.xlane.f32.xlu0 %v545
        %v547 = vpop.xlane.xlu0 %546
        %v548 = vsel %vm529, %v516, 0.0
        %549 = vadd.xlane.f32.xlu0 %v548
        %v550 = vpop.xlane.xlu0 %549
        %v551 = vsel %vm525, %v517, 0.0
        %552 = vadd.xlane.f32.xlu0 %v551
        %v553 = vpop.xlane.xlu0 %552
        %v554 = vsel %vm529, %v518, 0.0
        %555 = vadd.xlane.f32.xlu0 %v554
        %v556 = vpop.xlane.xlu0 %555
        %v557 = vsel %vm525, %v519, 0.0
        %558 = vadd.xlane.f32.xlu0 %v557
        %v559 = vpop.xlane.xlu0 %558
        %v560 = vsel %vm529, %v520, 0.0
        %561 = vadd.xlane.f32.xlu0 %v560
        %v562 = vpop.xlane.xlu0 %561
        %v563 = vsel %vm525, %v521, 0.0
        %564 = vadd.xlane.f32.xlu0 %v563
        %v565 = vpop.xlane.xlu0 %564
        %v566 = vsel %vm529, %v522, 0.0
        %567 = vadd.xlane.f32.xlu0 %v566
        %v568 = vpop.xlane.xlu0 %567
        %v569 = vsel %vm525, %v523, 0.0
        %570 = vadd.xlane.f32.xlu0 %v569
        %v571 = vpop.xlane.xlu0 %570
        %v572 = vsel %vm529, %v524, 0.0
        %573 = vadd.xlane.f32.xlu0 %v572
        %v574 = vpop.xlane.xlu0 %573
        %v575 = vmul.f32 %v528, 0.25
        %v576 = vmul.f32 %v532, 0.25
        %v577 = vmul.f32 %v535, 0.25
        %v578 = vmul.f32 %v538, 0.25
        %v579 = vmul.f32 %v541, 0.25
        %v580 = vmul.f32 %v544, 0.25
        %v581 = vmul.f32 %v547, 0.25
        %v582 = vmul.f32 %v550, 0.25
        %v583 = vmul.f32 %v553, 0.25
        %v584 = vmul.f32 %v556, 0.25
        %v585 = vmul.f32 %v559, 0.25
        %v586 = vmul.f32 %v562, 0.25
        %v587 = vmul.f32 %v565, 0.25
        %v588 = vmul.f32 %v568, 0.25
        %v589 = vmul.f32 %v571, 0.25
        %v590 = vmul.f32 %v574, 0.25
        %v591 = vcombine.high %v317, %v317
        %v593 = vunpack.c.l.s4 1966171168
        %v594 = vunpack.c.0.s8 %v593
        %v595 = vlaneseq
        %v596 = vshrl.u32 %v595, 7
        %v597 = vsub.s32 %v594, %v596
        %v598 = vrot.slane %v317, %v597
        %v600 = vunpack.c.l.s4 1966171168
        %v601 = vunpack.c.0.s8 %v600
        %v602 = vlaneseq
        %v603 = vshrl.u32 %v602, 7
        %v604 = vsub.s32 %v601, %v603
        %v605 = vrot.slane %v591, %v604
        %v606 = vcombine.high %v598, %v598
        %v607 = vcombine.high %v605, %v605
        %v609 = vunpack.c.l.s4 1966171168
        %v610 = vunpack.c.0.s8 %v609
        %v611 = vlaneseq
        %v612 = vshrl.u32 %v611, 7
        %v613 = vsub.s32 %v610, %v612
        %v614 = vrot.slane %v598, %v613
        %v616 = vunpack.c.l.s4 1966171168
        %v617 = vunpack.c.0.s8 %v616
        %v618 = vlaneseq
        %v619 = vshrl.u32 %v618, 7
        %v620 = vsub.s32 %v617, %v619
        %v621 = vrot.slane %v605, %v620
        %v623 = vunpack.c.l.s4 1966171168
        %v624 = vunpack.c.0.s8 %v623
        %v625 = vlaneseq
        %v626 = vshrl.u32 %v625, 7
        %v627 = vsub.s32 %v624, %v626
        %v628 = vrot.slane %v606, %v627
        %v630 = vunpack.c.l.s4 1966171168
        %v631 = vunpack.c.0.s8 %v630
        %v632 = vlaneseq
        %v633 = vshrl.u32 %v632, 7
        %v634 = vsub.s32 %v631, %v633
        %v635 = vrot.slane %v607, %v634
        %v636 = vcombine.high %v614, %v614
        %v637 = vcombine.high %v621, %v621
        %v638 = vcombine.high %v628, %v628
        %v639 = vcombine.high %v635, %v635
        %v640 = vlaneseq
        %v641 = vshrl.u32 %v640, 7
        %v642 = vsub.s32 0, %v641
        %v643 = vrot.slane %v614, %v642
        %v644 = vlaneseq
        %v645 = vshrl.u32 %v644, 7
        %v646 = vsub.s32 0, %v645
        %v647 = vrot.slane %v628, %v646
        %v648 = vlaneseq
        %v649 = vshrl.u32 %v648, 7
        %v650 = vsub.s32 0, %v649
        %v651 = vrot.slane %v636, %v650
        %v652 = vlaneseq
        %v653 = vshrl.u32 %v652, 7
        %v654 = vsub.s32 0, %v653
        %v655 = vrot.slane %v638, %v654
        %v656 = vlaneseq
        %v657 = vshrl.u32 %v656, 7
        %v658 = vsub.s32 0, %v657
        %v659 = vrot.slane %v621, %v658
        %v660 = vlaneseq
        %v661 = vshrl.u32 %v660, 7
        %v662 = vsub.s32 0, %v661
        %v663 = vrot.slane %v635, %v662
        %v664 = vlaneseq
        %v665 = vshrl.u32 %v664, 7
        %v666 = vsub.s32 0, %v665
        %v667 = vrot.slane %v637, %v666
        %v668 = vlaneseq
        %v669 = vshrl.u32 %v668, 7
        %v670 = vsub.s32 0, %v669
        %v671 = vrot.slane %v639, %v670
        %vm672 = vcmp.eq.s32.totalorder %v643, %v320
        %vm673 = vcmp.eq.s32.totalorder %v643, %v321
        %vm674 = vcmp.eq.s32.totalorder %v647, %v320
        %vm675 = vcmp.eq.s32.totalorder %v647, %v321
        %vm676 = vcmp.eq.s32.totalorder %v651, %v320
        %vm677 = vcmp.eq.s32.totalorder %v651, %v321
        %vm678 = vcmp.eq.s32.totalorder %v655, %v320
        %vm679 = vcmp.eq.s32.totalorder %v655, %v321
        %vm680 = vcmp.eq.s32.totalorder %v659, %v320
        %vm681 = vcmp.eq.s32.totalorder %v659, %v321
        %vm682 = vcmp.eq.s32.totalorder %v663, %v320
        %vm683 = vcmp.eq.s32.totalorder %v663, %v321
        %vm684 = vcmp.eq.s32.totalorder %v667, %v320
        %vm685 = vcmp.eq.s32.totalorder %v667, %v321
        %vm686 = vcmp.eq.s32.totalorder %v671, %v320
        %vm687 = vcmp.eq.s32.totalorder %v671, %v321
        %v688 = vsel %vm672, %v472, 0.0
        %v689 = vsel %vm673, %v472, 0.0
        %v690 = vsel %vm674, %v476, 0.0
        %v691 = vsel %vm675, %v476, 0.0
        %v692 = vsel %vm676, %v480, 0.0
        %v693 = vsel %vm677, %v480, 0.0
        %v694 = vsel %vm678, %v484, 0.0
        %v695 = vsel %vm679, %v484, 0.0
        %v696 = vsel %vm680, %v488, 0.0
        %v697 = vsel %vm681, %v488, 0.0
        %v698 = vsel %vm682, %v492, 0.0
        %v699 = vsel %vm683, %v492, 0.0
        %v700 = vsel %vm684, %v496, 0.0
        %v701 = vsel %vm685, %v496, 0.0
        %v702 = vsel %vm686, %v500, 0.0
        %v703 = vsel %vm687, %v500, 0.0
        %v704 = vsel %vm525, %v688, 0.0
        %705 = vadd.xlane.f32.xlu0 %v704
        %v706 = vpop.xlane.xlu0 %705
        %v707 = vsel %vm529, %v689, 0.0
        %708 = vadd.xlane.f32.xlu0 %v707
        %v709 = vpop.xlane.xlu0 %708
        %v710 = vsel %vm525, %v690, 0.0
        %711 = vadd.xlane.f32.xlu0 %v710
        %v712 = vpop.xlane.xlu0 %711
        %v713 = vsel %vm529, %v691, 0.0
        %714 = vadd.xlane.f32.xlu0 %v713
        %v715 = vpop.xlane.xlu0 %714
        %v716 = vsel %vm525, %v692, 0.0
        %717 = vadd.xlane.f32.xlu0 %v716
        %v718 = vpop.xlane.xlu0 %717
        %v719 = vsel %vm529, %v693, 0.0
        %720 = vadd.xlane.f32.xlu0 %v719
        %v721 = vpop.xlane.xlu0 %720
        %v722 = vsel %vm525, %v694, 0.0
        %723 = vadd.xlane.f32.xlu0 %v722
        %v724 = vpop.xlane.xlu0 %723
        %v725 = vsel %vm529, %v695, 0.0
        %726 = vadd.xlane.f32.xlu0 %v725
        %v727 = vpop.xlane.xlu0 %726
        %v728 = vsel %vm525, %v696, 0.0
        %729 = vadd.xlane.f32.xlu0 %v728
        %v730 = vpop.xlane.xlu0 %729
        %v731 = vsel %vm529, %v697, 0.0
        %732 = vadd.xlane.f32.xlu0 %v731
        %v733 = vpop.xlane.xlu0 %732
        %v734 = vsel %vm525, %v698, 0.0
        %735 = vadd.xlane.f32.xlu0 %v734
        %v736 = vpop.xlane.xlu0 %735
        %v737 = vsel %vm529, %v699, 0.0
        %738 = vadd.xlane.f32.xlu0 %v737
        %v739 = vpop.xlane.xlu0 %738
        %v740 = vsel %vm525, %v700, 0.0
        %741 = vadd.xlane.f32.xlu0 %v740
        %v742 = vpop.xlane.xlu0 %741
        %v743 = vsel %vm529, %v701, 0.0
        %744 = vadd.xlane.f32.xlu0 %v743
        %v745 = vpop.xlane.xlu0 %744
        %v746 = vsel %vm525, %v702, 0.0
        %747 = vadd.xlane.f32.xlu0 %v746
        %v748 = vpop.xlane.xlu0 %747
        %v749 = vsel %vm529, %v703, 0.0
        %750 = vadd.xlane.f32.xlu0 %v749
        %v751 = vpop.xlane.xlu0 %750
        %v752 = vmul.f32 %v706, 0.25
        %v753 = vmul.f32 %v709, 0.25
        %v754 = vmul.f32 %v712, 0.25
        %v755 = vmul.f32 %v715, 0.25
        %v756 = vmul.f32 %v718, 0.25
        %v757 = vmul.f32 %v721, 0.25
        %v758 = vmul.f32 %v724, 0.25
        %v759 = vmul.f32 %v727, 0.25
        %v760 = vmul.f32 %v730, 0.25
        %v761 = vmul.f32 %v733, 0.25
        %v762 = vmul.f32 %v736, 0.25
        %v763 = vmul.f32 %v739, 0.25
        %v764 = vmul.f32 %v742, 0.25
        %v765 = vmul.f32 %v745, 0.25
        %v766 = vmul.f32 %v748, 0.25
        %v767 = vmul.f32 %v751, 0.25
        %v768 = vld [vmem:[%s315] sm:$0xff]
        %v769 = vld [vmem:[%s315 + $0x8] sm:$0x1]
        %v770 = vld [vmem:[#allocation2] sm:$0xff]
        %v771 = vld [vmem:[#allocation2 + $0x8] sm:$0x1]
        %v788 = vlaneseq
        %v789 = vand.u32 %v788, 127
        %v790 = vlaneseq
        %v791 = vshrl.u32 %v790, 7
        %v792 = vsub.s32 %v789, %v791
        %v793 = vrot.slane %v752, %v792
        %v794 = vadd.s32 %v789, 4294967288
        %v795 = vlaneseq
        %v796 = vshrl.u32 %v795, 7
        %v797 = vsub.s32 %v794, %v796
        %v798 = vrot.slane %v753, %v797
        %vm799 = vcmask 130112
        %v800 = vsel %vm799, %v798, %v793
        %v801 = vlaneseq
        %v802 = vshrl.u32 %v801, 7
        %v803 = vsub.s32 %v789, %v802
        %v804 = vrot.slane %v754, %v803
        %v805 = vlaneseq
        %v806 = vshrl.u32 %v805, 7
        %v807 = vsub.s32 %v794, %v806
        %v808 = vrot.slane %v755, %v807
        %v809 = vsel %vm799, %v808, %v804
        %v810 = vlaneseq
        %v811 = vshrl.u32 %v810, 7
        %v812 = vsub.s32 %v789, %v811
        %v813 = vrot.slane %v756, %v812
        %v814 = vlaneseq
        %v815 = vshrl.u32 %v814, 7
        %v816 = vsub.s32 %v794, %v815
        %v817 = vrot.slane %v757, %v816
        %v818 = vsel %vm799, %v817, %v813
        %v819 = vlaneseq
        %v820 = vshrl.u32 %v819, 7
        %v821 = vsub.s32 %v789, %v820
        %v822 = vrot.slane %v758, %v821
        %v823 = vlaneseq
        %v824 = vshrl.u32 %v823, 7
        %v825 = vsub.s32 %v794, %v824
        %v826 = vrot.slane %v759, %v825
        %v827 = vsel %vm799, %v826, %v822
        %v828 = vlaneseq
        %v829 = vshrl.u32 %v828, 7
        %v830 = vsub.s32 %v789, %v829
        %v831 = vrot.slane %v760, %v830
        %v832 = vlaneseq
        %v833 = vshrl.u32 %v832, 7
        %v834 = vsub.s32 %v794, %v833
        %v835 = vrot.slane %v761, %v834
        %v836 = vsel %vm799, %v835, %v831
        %v837 = vlaneseq
        %v838 = vshrl.u32 %v837, 7
        %v839 = vsub.s32 %v789, %v838
        %v840 = vrot.slane %v762, %v839
        %v841 = vlaneseq
        %v842 = vshrl.u32 %v841, 7
        %v843 = vsub.s32 %v794, %v842
        %v844 = vrot.slane %v763, %v843
        %v845 = vsel %vm799, %v844, %v840
        %v846 = vlaneseq
        %v847 = vshrl.u32 %v846, 7
        %v848 = vsub.s32 %v789, %v847
        %v849 = vrot.slane %v764, %v848
        %v850 = vlaneseq
        %v851 = vshrl.u32 %v850, 7
        %v852 = vsub.s32 %v794, %v851
        %v853 = vrot.slane %v765, %v852
        %v854 = vsel %vm799, %v853, %v849
        %v855 = vlaneseq
        %v856 = vshrl.u32 %v855, 7
        %v857 = vsub.s32 %v789, %v856
        %v858 = vrot.slane %v766, %v857
        %v859 = vlaneseq
        %v860 = vshrl.u32 %v859, 7
        %v861 = vsub.s32 %v794, %v860
        %v862 = vrot.slane %v767, %v861
        %v863 = vsel %vm799, %v862, %v858
        %vm864 = vcmask 1041409
        %v865 = vsel %vm864, %v809, %v800
        %vm866 = vcmask 1042434
        %v867 = vsel %vm866, %v818, %v865
        %vm868 = vcmask 1043459
        %v869 = vsel %vm868, %v827, %v867
        %vm870 = vcmask 1044484
        %v871 = vsel %vm870, %v836, %v869
        %vm872 = vcmask 1045509
        %v873 = vsel %vm872, %v845, %v871
        %vm874 = vcmask 1046534
        %v875 = vsel %vm874, %v854, %v873
        %vm876 = vcmask 1047559
        %v877 = vsel %vm876, %v863, %v875
        %vm878 = vcmask 72704
        %v879 = vsel %vm878, %v877, 0
        %vm881 = vcmask 1040384
        %v883 = vsel %vm881, %v771, 0
        %885 = vmatprep.subr.mxu0 0.0
        %886 = vmatpush1.msra.mxu0 0.0
        %887 = vmatprep.subr.mxu0 0.0
        %888 = vmatpush1.msra.mxu0 0.0
        %889 = vmatprep.subr.mxu0 0.0
        %890 = vmatpush1.msra.mxu0 0.0
        %891 = vmatprep.subr.mxu0 0.0
        %892 = vmatpush1.msra.mxu0 0.0
        %893 = vmatprep.subr.mxu0 0.0
        %894 = vmatpush1.msra.mxu0 0.0
        %895 = vmatprep.subr.mxu0 0.0
        %896 = vmatpush1.msra.mxu0 0.0
        %897 = vmatprep.subr.mxu0 0.0
        %898 = vmatpush1.msra.mxu0 0.0
        %899 = vmatprep.subr.mxu0 0.0
        %900 = vmatpush1.msra.mxu0 0.0
        %901 = vmatprep.subr.mxu0 0.0
        %902 = vmatpush1.msra.mxu0 0.0
        %903 = vmatprep.subr.mxu0 0.0
        %904 = vmatpush1.msra.mxu0 0.0
        %905 = vmatprep.subr.mxu0 0.0
        %906 = vmatpush1.msra.mxu0 0.0
        %907 = vmatprep.subr.mxu0 0.0
        %908 = vmatpush1.msra.mxu0 0.0
        %909 = vmatprep.subr.mxu0 0.0
        %910 = vmatpush1.msra.mxu0 0.0
        %911 = vmatprep.subr.mxu0 0.0
        %912 = vmatpush1.msra.mxu0 0.0
        %913 = vmatprep.subr.mxu0 0.0
        %v914 = vand.u32 %v883, 4294901760
        %915 = vmatpush1.msra.mxu0 %v914
        %916 = vmatprep.subr.mxu0 0.0
        %v917 = vand.u32 %v770, 4294901760
        %918 = vmatpush1.msra.mxu0 %v917
        %919 = vmatprep.subr.mxu0 0.0
        %920 = vmatpush2.msra.mxu0 0.0
        %921 = vmatprep.subr.mxu0 0.0
        %922 = vmatpush2.msra.mxu0 0.0
        %923 = vmatprep.subr.mxu0 0.0
        %924 = vmatpush2.msra.mxu0 0.0
        %925 = vmatprep.subr.mxu0 0.0
        %926 = vmatpush2.msra.mxu0 0.0
        %927 = vmatprep.subr.mxu0 0.0
        %928 = vmatpush2.msra.mxu0 0.0
        %929 = vmatprep.subr.mxu0 0.0
        %930 = vmatpush2.msra.mxu0 0.0
        %931 = vmatprep.subr.mxu0 0.0
        %932 = vmatpush2.msra.mxu0 0.0
        %933 = vmatprep.subr.mxu0 0.0
        %934 = vmatpush2.msra.mxu0 0.0
        %935 = vmatprep.subr.mxu0 0.0
        %936 = vmatpush2.msra.mxu0 0.0
        %937 = vmatprep.subr.mxu0 0.0
        %938 = vmatpush2.msra.mxu0 0.0
        %939 = vmatprep.subr.mxu0 0.0
        %940 = vmatpush2.msra.mxu0 0.0
        %941 = vmatprep.subr.mxu0 0.0
        %942 = vmatpush2.msra.mxu0 0.0
        %943 = vmatprep.subr.mxu0 0.0
        %944 = vmatpush2.msra.mxu0 0.0
        %945 = vmatprep.subr.mxu0 0.0
        %946 = vmatpush2.msra.mxu0 0.0
        %947 = vmatprep.subr.mxu0 0.0
        %948 = vmatpush2.msra.mxu0 0.0
        %949 = vmatprep.subr.mxu0 0.0
        %950 = vmatpush2.msra.mxu0 0.0
        %951 = vmatprep.mubr.f32.mxu0 0.0
        %v952 = vand.u32 %v879, 4294901760
        %v953 = vsub.f32 %v879, %v952
        %v954 = vand.u32 %v953, 4294901760
        %v955 = vsub.f32 %v953, %v954
        %v956 = vand.u32 %v955, 4294901760
        %957 = vmatmul.mubr.f32.gmra.mxu0 %v956
        %v958 = vpop.f32.mrf.mxu0
        %v959 = vadd.f32 0.0, %v958
        %v960 = vpop.f32.mrf.mxu0
        %961 = vdwg.mxu0
        %962 = vmatprep.subr.mxu0 0.0
        %963 = vmatpush1.msra.mxu0 0.0
        %964 = vmatprep.subr.mxu0 0.0
        %965 = vmatpush1.msra.mxu0 0.0
        %966 = vmatprep.subr.mxu0 0.0
        %967 = vmatpush1.msra.mxu0 0.0
        %968 = vmatprep.subr.mxu0 0.0
        %969 = vmatpush1.msra.mxu0 0.0
        %970 = vmatprep.subr.mxu0 0.0
        %971 = vmatpush1.msra.mxu0 0.0
        %972 = vmatprep.subr.mxu0 0.0
        %973 = vmatpush1.msra.mxu0 0.0
        %974 = vmatprep.subr.mxu0 0.0
        %975 = vmatpush1.msra.mxu0 0.0
        %976 = vmatprep.subr.mxu0 0.0
        %977 = vmatpush1.msra.mxu0 0.0
        %978 = vmatprep.subr.mxu0 0.0
        %979 = vmatpush1.msra.mxu0 0.0
        %980 = vmatprep.subr.mxu0 0.0
        %981 = vmatpush1.msra.mxu0 0.0
        %982 = vmatprep.subr.mxu0 0.0
        %983 = vmatpush1.msra.mxu0 0.0
        %984 = vmatprep.subr.mxu0 0.0
        %985 = vmatpush1.msra.mxu0 0.0
        %986 = vmatprep.subr.mxu0 0.0
        %987 = vmatpush1.msra.mxu0 0.0
        %988 = vmatprep.subr.mxu0 0.0
        %989 = vmatpush1.msra.mxu0 0.0
        %990 = vmatprep.subr.mxu0 0.0
        %v991 = vand.u32 %v883, 4294901760
        %v992 = vsub.f32 %v883, %v991
        %v993 = vand.u32 %v992, 4294901760
        %v994 = vsub.f32 %v992, %v993
        %v995 = vand.u32 %v994, 4294901760
        %996 = vmatpush1.msra.mxu0 %v995
        %997 = vmatprep.subr.mxu0 0.0
        %v998 = vand.u32 %v770, 4294901760
        %v999 = vsub.f32 %v770, %v998
        %v1000 = vand.u32 %v999, 4294901760
        %v1001 = vsub.f32 %v999, %v1000
        %v1002 = vand.u32 %v1001, 4294901760
        %1003 = vmatpush1.msra.mxu0 %v1002
        %1004 = vmatprep.subr.mxu0 0.0
        %1005 = vmatpush2.msra.mxu0 0.0
        %1006 = vmatprep.subr.mxu0 0.0
        %1007 = vmatpush2.msra.mxu0 0.0
        %1008 = vmatprep.subr.mxu0 0.0
        %1009 = vmatpush2.msra.mxu0 0.0
        %1010 = vmatprep.subr.mxu0 0.0
        %1011 = vmatpush2.msra.mxu0 0.0
        %1012 = vmatprep.subr.mxu0 0.0
        %1013 = vmatpush2.msra.mxu0 0.0
        %1014 = vmatprep.subr.mxu0 0.0
        %1015 = vmatpush2.msra.mxu0 0.0
        %1016 = vmatprep.subr.mxu0 0.0
        %1017 = vmatpush2.msra.mxu0 0.0
        %1018 = vmatprep.subr.mxu0 0.0
        %1019 = vmatpush2.msra.mxu0 0.0
        %1020 = vmatprep.subr.mxu0 0.0
        %1021 = vmatpush2.msra.mxu0 0.0
        %1022 = vmatprep.subr.mxu0 0.0
        %1023 = vmatpush2.msra.mxu0 0.0
        %1024 = vmatprep.subr.mxu0 0.0
        %1025 = vmatpush2.msra.mxu0 0.0
        %1026 = vmatprep.subr.mxu0 0.0
        %1027 = vmatpush2.msra.mxu0 0.0
        %1028 = vmatprep.subr.mxu0 0.0
        %1029 = vmatpush2.msra.mxu0 0.0
        %1030 = vmatprep.subr.mxu0 0.0
        %1031 = vmatpush2.msra.mxu0 0.0
        %1032 = vmatprep.subr.mxu0 0.0
        %1033 = vmatpush2.msra.mxu0 0.0
        %1034 = vmatprep.subr.mxu0 0.0
        %1035 = vmatpush2.msra.mxu0 0.0
        %1036 = vmatprep.mubr.f32.mxu0 0.0
        %v1037 = vand.u32 %v879, 4294901760
        %1038 = vmatmul.mubr.f32.gmra.mxu0 %v1037
        %v1039 = vpop.f32.mrf.mxu0
        %v1040 = vadd.f32 %v959, %v1039
        %v1041 = vpop.f32.mrf.mxu0
        %1042 = vdwg.mxu0
        %1043 = vmatprep.subr.mxu0 0.0
        %1044 = vmatpush1.msra.mxu0 0.0
        %1045 = vmatprep.subr.mxu0 0.0
        %1046 = vmatpush1.msra.mxu0 0.0
        %1047 = vmatprep.subr.mxu0 0.0
        %1048 = vmatpush1.msra.mxu0 0.0
        %1049 = vmatprep.subr.mxu0 0.0
        %1050 = vmatpush1.msra.mxu0 0.0
        %1051 = vmatprep.subr.mxu0 0.0
        %1052 = vmatpush1.msra.mxu0 0.0
        %1053 = vmatprep.subr.mxu0 0.0
        %1054 = vmatpush1.msra.mxu0 0.0
        %1055 = vmatprep.subr.mxu0 0.0
        %1056 = vmatpush1.msra.mxu0 0.0
        %1057 = vmatprep.subr.mxu0 0.0
        %1058 = vmatpush1.msra.mxu0 0.0
        %1059 = vmatprep.subr.mxu0 0.0
        %1060 = vmatpush1.msra.mxu0 0.0
        %1061 = vmatprep.subr.mxu0 0.0
        %1062 = vmatpush1.msra.mxu0 0.0
        %1063 = vmatprep.subr.mxu0 0.0
        %1064 = vmatpush1.msra.mxu0 0.0
        %1065 = vmatprep.subr.mxu0 0.0
        %1066 = vmatpush1.msra.mxu0 0.0
        %1067 = vmatprep.subr.mxu0 0.0
        %1068 = vmatpush1.msra.mxu0 0.0
        %1069 = vmatprep.subr.mxu0 0.0
        %1070 = vmatpush1.msra.mxu0 0.0
        %1071 = vmatprep.subr.mxu0 0.0
        %v1072 = vand.u32 %v883, 4294901760
        %v1073 = vsub.f32 %v883, %v1072
        %1074 = vmatpush1.msra.mxu0 %v1073
        %1075 = vmatprep.subr.mxu0 0.0
        %v1076 = vand.u32 %v770, 4294901760
        %v1077 = vsub.f32 %v770, %v1076
        %1078 = vmatpush1.msra.mxu0 %v1077
        %1079 = vmatprep.subr.mxu0 0.0
        %1080 = vmatpush2.msra.mxu0 0.0
        %1081 = vmatprep.subr.mxu0 0.0
        %1082 = vmatpush2.msra.mxu0 0.0
        %1083 = vmatprep.subr.mxu0 0.0
        %1084 = vmatpush2.msra.mxu0 0.0
        %1085 = vmatprep.subr.mxu0 0.0
        %1086 = vmatpush2.msra.mxu0 0.0
        %1087 = vmatprep.subr.mxu0 0.0
        %1088 = vmatpush2.msra.mxu0 0.0
        %1089 = vmatprep.subr.mxu0 0.0
        %1090 = vmatpush2.msra.mxu0 0.0
        %1091 = vmatprep.subr.mxu0 0.0
        %1092 = vmatpush2.msra.mxu0 0.0
        %1093 = vmatprep.subr.mxu0 0.0
        %1094 = vmatpush2.msra.mxu0 0.0
        %1095 = vmatprep.subr.mxu0 0.0
        %1096 = vmatpush2.msra.mxu0 0.0
        %1097 = vmatprep.subr.mxu0 0.0
        %1098 = vmatpush2.msra.mxu0 0.0
        %1099 = vmatprep.subr.mxu0 0.0
        %1100 = vmatpush2.msra.mxu0 0.0
        %1101 = vmatprep.subr.mxu0 0.0
        %1102 = vmatpush2.msra.mxu0 0.0
        %1103 = vmatprep.subr.mxu0 0.0
        %1104 = vmatpush2.msra.mxu0 0.0
        %1105 = vmatprep.subr.mxu0 0.0
        %1106 = vmatpush2.msra.mxu0 0.0
        %1107 = vmatprep.subr.mxu0 0.0
        %1108 = vmatpush2.msra.mxu0 0.0
        %1109 = vmatprep.subr.mxu0 0.0
        %1110 = vmatpush2.msra.mxu0 0.0
        %1111 = vmatprep.mubr.f32.mxu0 0.0
        %v1112 = vand.u32 %v879, 4294901760
        %v1113 = vsub.f32 %v879, %v1112
        %1114 = vmatmul.mubr.f32.gmra.mxu0 %v1113
        %v1115 = vpop.f32.mrf.mxu0
        %v1116 = vadd.f32 %v1040, %v1115
        %v1117 = vpop.f32.mrf.mxu0
        %1118 = vdwg.mxu0
        %1119 = vmatprep.subr.mxu0 0.0
        %1120 = vmatpush1.msra.mxu0 0.0
        %1121 = vmatprep.subr.mxu0 0.0
        %1122 = vmatpush1.msra.mxu0 0.0
        %1123 = vmatprep.subr.mxu0 0.0
        %1124 = vmatpush1.msra.mxu0 0.0
        %1125 = vmatprep.subr.mxu0 0.0
        %1126 = vmatpush1.msra.mxu0 0.0
        %1127 = vmatprep.subr.mxu0 0.0
        %1128 = vmatpush1.msra.mxu0 0.0
        %1129 = vmatprep.subr.mxu0 0.0
        %1130 = vmatpush1.msra.mxu0 0.0
        %1131 = vmatprep.subr.mxu0 0.0
        %1132 = vmatpush1.msra.mxu0 0.0
        %1133 = vmatprep.subr.mxu0 0.0
        %1134 = vmatpush1.msra.mxu0 0.0
        %1135 = vmatprep.subr.mxu0 0.0
        %1136 = vmatpush1.msra.mxu0 0.0
        %1137 = vmatprep.subr.mxu0 0.0
        %1138 = vmatpush1.msra.mxu0 0.0
        %1139 = vmatprep.subr.mxu0 0.0
        %1140 = vmatpush1.msra.mxu0 0.0
        %1141 = vmatprep.subr.mxu0 0.0
        %1142 = vmatpush1.msra.mxu0 0.0
        %1143 = vmatprep.subr.mxu0 0.0
        %1144 = vmatpush1.msra.mxu0 0.0
        %1145 = vmatprep.subr.mxu0 0.0
        %1146 = vmatpush1.msra.mxu0 0.0
        %1147 = vmatprep.subr.mxu0 0.0
        %v1148 = vand.u32 %v883, 4294901760
        %1149 = vmatpush1.msra.mxu0 %v1148
        %1150 = vmatprep.subr.mxu0 0.0
        %v1151 = vand.u32 %v770, 4294901760
        %1152 = vmatpush1.msra.mxu0 %v1151
        %1153 = vmatprep.subr.mxu0 0.0
        %1154 = vmatpush2.msra.mxu0 0.0
        %1155 = vmatprep.subr.mxu0 0.0
        %1156 = vmatpush2.msra.mxu0 0.0
        %1157 = vmatprep.subr.mxu0 0.0
        %1158 = vmatpush2.msra.mxu0 0.0
        %1159 = vmatprep.subr.mxu0 0.0
        %1160 = vmatpush2.msra.mxu0 0.0
        %1161 = vmatprep.subr.mxu0 0.0
        %1162 = vmatpush2.msra.mxu0 0.0
        %1163 = vmatprep.subr.mxu0 0.0
        %1164 = vmatpush2.msra.mxu0 0.0
        %1165 = vmatprep.subr.mxu0 0.0
        %1166 = vmatpush2.msra.mxu0 0.0
        %1167 = vmatprep.subr.mxu0 0.0
        %1168 = vmatpush2.msra.mxu0 0.0
        %1169 = vmatprep.subr.mxu0 0.0
        %1170 = vmatpush2.msra.mxu0 0.0
        %1171 = vmatprep.subr.mxu0 0.0
        %1172 = vmatpush2.msra.mxu0 0.0
        %1173 = vmatprep.subr.mxu0 0.0
        %1174 = vmatpush2.msra.mxu0 0.0
        %1175 = vmatprep.subr.mxu0 0.0
        %1176 = vmatpush2.msra.mxu0 0.0
        %1177 = vmatprep.subr.mxu0 0.0
        %1178 = vmatpush2.msra.mxu0 0.0
        %1179 = vmatprep.subr.mxu0 0.0
        %1180 = vmatpush2.msra.mxu0 0.0
        %1181 = vmatprep.subr.mxu0 0.0
        %1182 = vmatpush2.msra.mxu0 0.0
        %1183 = vmatprep.subr.mxu0 0.0
        %1184 = vmatpush2.msra.mxu0 0.0
        %1185 = vmatprep.mubr.f32.mxu0 0.0
        %v1186 = vand.u32 %v879, 4294901760
        %v1187 = vsub.f32 %v879, %v1186
        %v1188 = vand.u32 %v1187, 4294901760
        %1189 = vmatmul.mubr.f32.gmra.mxu0 %v1188
        %v1190 = vpop.f32.mrf.mxu0
        %v1191 = vadd.f32 %v1116, %v1190
        %v1192 = vpop.f32.mrf.mxu0
        %1193 = vdwg.mxu0
        %1194 = vmatprep.subr.mxu0 0.0
        %1195 = vmatpush1.msra.mxu0 0.0
        %1196 = vmatprep.subr.mxu0 0.0
        %1197 = vmatpush1.msra.mxu0 0.0
        %1198 = vmatprep.subr.mxu0 0.0
        %1199 = vmatpush1.msra.mxu0 0.0
        %1200 = vmatprep.subr.mxu0 0.0
        %1201 = vmatpush1.msra.mxu0 0.0
        %1202 = vmatprep.subr.mxu0 0.0
        %1203 = vmatpush1.msra.mxu0 0.0
        %1204 = vmatprep.subr.mxu0 0.0
        %1205 = vmatpush1.msra.mxu0 0.0
        %1206 = vmatprep.subr.mxu0 0.0
        %1207 = vmatpush1.msra.mxu0 0.0
        %1208 = vmatprep.subr.mxu0 0.0
        %1209 = vmatpush1.msra.mxu0 0.0
        %1210 = vmatprep.subr.mxu0 0.0
        %1211 = vmatpush1.msra.mxu0 0.0
        %1212 = vmatprep.subr.mxu0 0.0
        %1213 = vmatpush1.msra.mxu0 0.0
        %1214 = vmatprep.subr.mxu0 0.0
        %1215 = vmatpush1.msra.mxu0 0.0
        %1216 = vmatprep.subr.mxu0 0.0
        %1217 = vmatpush1.msra.mxu0 0.0
        %1218 = vmatprep.subr.mxu0 0.0
        %1219 = vmatpush1.msra.mxu0 0.0
        %1220 = vmatprep.subr.mxu0 0.0
        %1221 = vmatpush1.msra.mxu0 0.0
        %1222 = vmatprep.subr.mxu0 0.0
        %v1223 = vand.u32 %v883, 4294901760
        %v1224 = vsub.f32 %v883, %v1223
        %v1225 = vand.u32 %v1224, 4294901760
        %1226 = vmatpush1.msra.mxu0 %v1225
        %1227 = vmatprep.subr.mxu0 0.0
        %v1228 = vand.u32 %v770, 4294901760
        %v1229 = vsub.f32 %v770, %v1228
        %v1230 = vand.u32 %v1229, 4294901760
        %1231 = vmatpush1.msra.mxu0 %v1230
        %1232 = vmatprep.subr.mxu0 0.0
        %1233 = vmatpush2.msra.mxu0 0.0
        %1234 = vmatprep.subr.mxu0 0.0
        %1235 = vmatpush2.msra.mxu0 0.0
        %1236 = vmatprep.subr.mxu0 0.0
        %1237 = vmatpush2.msra.mxu0 0.0
        %1238 = vmatprep.subr.mxu0 0.0
        %1239 = vmatpush2.msra.mxu0 0.0
        %1240 = vmatprep.subr.mxu0 0.0
        %1241 = vmatpush2.msra.mxu0 0.0
        %1242 = vmatprep.subr.mxu0 0.0
        %1243 = vmatpush2.msra.mxu0 0.0
        %1244 = vmatprep.subr.mxu0 0.0
        %1245 = vmatpush2.msra.mxu0 0.0
        %1246 = vmatprep.subr.mxu0 0.0
        %1247 = vmatpush2.msra.mxu0 0.0
        %1248 = vmatprep.subr.mxu0 0.0
        %1249 = vmatpush2.msra.mxu0 0.0
        %1250 = vmatprep.subr.mxu0 0.0
        %1251 = vmatpush2.msra.mxu0 0.0
        %1252 = vmatprep.subr.mxu0 0.0
        %1253 = vmatpush2.msra.mxu0 0.0
        %1254 = vmatprep.subr.mxu0 0.0
        %1255 = vmatpush2.msra.mxu0 0.0
        %1256 = vmatprep.subr.mxu0 0.0
        %1257 = vmatpush2.msra.mxu0 0.0
        %1258 = vmatprep.subr.mxu0 0.0
        %1259 = vmatpush2.msra.mxu0 0.0
        %1260 = vmatprep.subr.mxu0 0.0
        %1261 = vmatpush2.msra.mxu0 0.0
        %1262 = vmatprep.subr.mxu0 0.0
        %1263 = vmatpush2.msra.mxu0 0.0
        %1264 = vmatprep.mubr.f32.mxu0 0.0
        %v1265 = vand.u32 %v879, 4294901760
        %1266 = vmatmul.mubr.f32.gmra.mxu0 %v1265
        %v1267 = vpop.f32.mrf.mxu0
        %v1268 = vadd.f32 %v1191, %v1267
        %v1269 = vpop.f32.mrf.mxu0
        %1270 = vdwg.mxu0
        %1271 = vmatprep.subr.mxu0 0.0
        %1272 = vmatpush1.msra.mxu0 0.0
        %1273 = vmatprep.subr.mxu0 0.0
        %1274 = vmatpush1.msra.mxu0 0.0
        %1275 = vmatprep.subr.mxu0 0.0
        %1276 = vmatpush1.msra.mxu0 0.0
        %1277 = vmatprep.subr.mxu0 0.0
        %1278 = vmatpush1.msra.mxu0 0.0
        %1279 = vmatprep.subr.mxu0 0.0
        %1280 = vmatpush1.msra.mxu0 0.0
        %1281 = vmatprep.subr.mxu0 0.0
        %1282 = vmatpush1.msra.mxu0 0.0
        %1283 = vmatprep.subr.mxu0 0.0
        %1284 = vmatpush1.msra.mxu0 0.0
        %1285 = vmatprep.subr.mxu0 0.0
        %1286 = vmatpush1.msra.mxu0 0.0
        %1287 = vmatprep.subr.mxu0 0.0
        %1288 = vmatpush1.msra.mxu0 0.0
        %1289 = vmatprep.subr.mxu0 0.0
        %1290 = vmatpush1.msra.mxu0 0.0
        %1291 = vmatprep.subr.mxu0 0.0
        %1292 = vmatpush1.msra.mxu0 0.0
        %1293 = vmatprep.subr.mxu0 0.0
        %1294 = vmatpush1.msra.mxu0 0.0
        %1295 = vmatprep.subr.mxu0 0.0
        %1296 = vmatpush1.msra.mxu0 0.0
        %1297 = vmatprep.subr.mxu0 0.0
        %1298 = vmatpush1.msra.mxu0 0.0
        %1299 = vmatprep.subr.mxu0 0.0
        %v1300 = vand.u32 %v883, 4294901760
        %1301 = vmatpush1.msra.mxu0 %v1300
        %1302 = vmatprep.subr.mxu0 0.0
        %v1303 = vand.u32 %v770, 4294901760
        %1304 = vmatpush1.msra.mxu0 %v1303
        %1305 = vmatprep.subr.mxu0 0.0
        %1306 = vmatpush2.msra.mxu0 0.0
        %1307 = vmatprep.subr.mxu0 0.0
        %1308 = vmatpush2.msra.mxu0 0.0
        %1309 = vmatprep.subr.mxu0 0.0
        %1310 = vmatpush2.msra.mxu0 0.0
        %1311 = vmatprep.subr.mxu0 0.0
        %1312 = vmatpush2.msra.mxu0 0.0
        %1313 = vmatprep.subr.mxu0 0.0
        %1314 = vmatpush2.msra.mxu0 0.0
        %1315 = vmatprep.subr.mxu0 0.0
        %1316 = vmatpush2.msra.mxu0 0.0
        %1317 = vmatprep.subr.mxu0 0.0
        %1318 = vmatpush2.msra.mxu0 0.0
        %1319 = vmatprep.subr.mxu0 0.0
        %1320 = vmatpush2.msra.mxu0 0.0
        %1321 = vmatprep.subr.mxu0 0.0
        %1322 = vmatpush2.msra.mxu0 0.0
        %1323 = vmatprep.subr.mxu0 0.0
        %1324 = vmatpush2.msra.mxu0 0.0
        %1325 = vmatprep.subr.mxu0 0.0
        %1326 = vmatpush2.msra.mxu0 0.0
        %1327 = vmatprep.subr.mxu0 0.0
        %1328 = vmatpush2.msra.mxu0 0.0
        %1329 = vmatprep.subr.mxu0 0.0
        %1330 = vmatpush2.msra.mxu0 0.0
        %1331 = vmatprep.subr.mxu0 0.0
        %1332 = vmatpush2.msra.mxu0 0.0
        %1333 = vmatprep.subr.mxu0 0.0
        %1334 = vmatpush2.msra.mxu0 0.0
        %1335 = vmatprep.subr.mxu0 0.0
        %1336 = vmatpush2.msra.mxu0 0.0
        %1337 = vmatprep.mubr.f32.mxu0 0.0
        %v1338 = vand.u32 %v879, 4294901760
        %1339 = vmatmul.mubr.f32.gmra.mxu0 %v1338
        %v1340 = vpop.f32.mrf.mxu0
        %v1341 = vadd.f32 %v1268, %v1340
        %v1342 = vpop.f32.mrf.mxu0
        %1343 = vdwg.mxu0
        %v1360 = vlaneseq
        %v1361 = vshrl.u32 %v1360, 7
        %v1362 = vsub.s32 %v789, %v1361
        %v1363 = vrot.slane %v575, %v1362
        %v1364 = vlaneseq
        %v1365 = vshrl.u32 %v1364, 7
        %v1366 = vsub.s32 %v794, %v1365
        %v1367 = vrot.slane %v576, %v1366
        %v1368 = vsel %vm799, %v1367, %v1363
        %v1369 = vlaneseq
        %v1370 = vshrl.u32 %v1369, 7
        %v1371 = vsub.s32 %v789, %v1370
        %v1372 = vrot.slane %v577, %v1371
        %v1373 = vlaneseq
        %v1374 = vshrl.u32 %v1373, 7
        %v1375 = vsub.s32 %v794, %v1374
        %v1376 = vrot.slane %v578, %v1375
        %v1377 = vsel %vm799, %v1376, %v1372
        %v1378 = vlaneseq
        %v1379 = vshrl.u32 %v1378, 7
        %v1380 = vsub.s32 %v789, %v1379
        %v1381 = vrot.slane %v579, %v1380
        %v1382 = vlaneseq
        %v1383 = vshrl.u32 %v1382, 7
        %v1384 = vsub.s32 %v794, %v1383
        %v1385 = vrot.slane %v580, %v1384
        %v1386 = vsel %vm799, %v1385, %v1381
        %v1387 = vlaneseq
        %v1388 = vshrl.u32 %v1387, 7
        %v1389 = vsub.s32 %v789, %v1388
        %v1390 = vrot.slane %v581, %v1389
        %v1391 = vlaneseq
        %v1392 = vshrl.u32 %v1391, 7
        %v1393 = vsub.s32 %v794, %v1392
        %v1394 = vrot.slane %v582, %v1393
        %v1395 = vsel %vm799, %v1394, %v1390
        %v1396 = vlaneseq
        %v1397 = vshrl.u32 %v1396, 7
        %v1398 = vsub.s32 %v789, %v1397
        %v1399 = vrot.slane %v583, %v1398
        %v1400 = vlaneseq
        %v1401 = vshrl.u32 %v1400, 7
        %v1402 = vsub.s32 %v794, %v1401
        %v1403 = vrot.slane %v584, %v1402
        %v1404 = vsel %vm799, %v1403, %v1399
        %v1405 = vlaneseq
        %v1406 = vshrl.u32 %v1405, 7
        %v1407 = vsub.s32 %v789, %v1406
        %v1408 = vrot.slane %v585, %v1407
        %v1409 = vlaneseq
        %v1410 = vshrl.u32 %v1409, 7
        %v1411 = vsub.s32 %v794, %v1410
        %v1412 = vrot.slane %v586, %v1411
        %v1413 = vsel %vm799, %v1412, %v1408
        %v1414 = vlaneseq
        %v1415 = vshrl.u32 %v1414, 7
        %v1416 = vsub.s32 %v789, %v1415
        %v1417 = vrot.slane %v587, %v1416
        %v1418 = vlaneseq
        %v1419 = vshrl.u32 %v1418, 7
        %v1420 = vsub.s32 %v794, %v1419
        %v1421 = vrot.slane %v588, %v1420
        %v1422 = vsel %vm799, %v1421, %v1417
        %v1423 = vlaneseq
        %v1424 = vshrl.u32 %v1423, 7
        %v1425 = vsub.s32 %v789, %v1424
        %v1426 = vrot.slane %v589, %v1425
        %v1427 = vlaneseq
        %v1428 = vshrl.u32 %v1427, 7
        %v1429 = vsub.s32 %v794, %v1428
        %v1430 = vrot.slane %v590, %v1429
        %v1431 = vsel %vm799, %v1430, %v1426
        %v1432 = vsel %vm864, %v1377, %v1368
        %v1433 = vsel %vm866, %v1386, %v1432
        %v1434 = vsel %vm868, %v1395, %v1433
        %v1435 = vsel %vm870, %v1404, %v1434
        %v1436 = vsel %vm872, %v1413, %v1435
        %v1437 = vsel %vm874, %v1422, %v1436
        %v1438 = vsel %vm876, %v1431, %v1437
        %v1439 = vsel %vm878, %v1438, 0
        %v1442 = vsel %vm881, %v769, 0
        %1444 = vmatprep.subr.mxu0 0.0
        %1445 = vmatpush1.msra.mxu0 0.0
        %1446 = vmatprep.subr.mxu0 0.0
        %1447 = vmatpush1.msra.mxu0 0.0
        %1448 = vmatprep.subr.mxu0 0.0
        %1449 = vmatpush1.msra.mxu0 0.0
        %1450 = vmatprep.subr.mxu0 0.0
        %1451 = vmatpush1.msra.mxu0 0.0
        %1452 = vmatprep.subr.mxu0 0.0
        %1453 = vmatpush1.msra.mxu0 0.0
        %1454 = vmatprep.subr.mxu0 0.0
        %1455 = vmatpush1.msra.mxu0 0.0
        %1456 = vmatprep.subr.mxu0 0.0
        %1457 = vmatpush1.msra.mxu0 0.0
        %1458 = vmatprep.subr.mxu0 0.0
        %1459 = vmatpush1.msra.mxu0 0.0
        %1460 = vmatprep.subr.mxu0 0.0
        %1461 = vmatpush1.msra.mxu0 0.0
        %1462 = vmatprep.subr.mxu0 0.0
        %1463 = vmatpush1.msra.mxu0 0.0
        %1464 = vmatprep.subr.mxu0 0.0
        %1465 = vmatpush1.msra.mxu0 0.0
        %1466 = vmatprep.subr.mxu0 0.0
        %1467 = vmatpush1.msra.mxu0 0.0
        %1468 = vmatprep.subr.mxu0 0.0
        %1469 = vmatpush1.msra.mxu0 0.0
        %1470 = vmatprep.subr.mxu0 0.0
        %1471 = vmatpush1.msra.mxu0 0.0
        %1472 = vmatprep.subr.mxu0 0.0
        %v1473 = vand.u32 %v1442, 4294901760
        %1474 = vmatpush1.msra.mxu0 %v1473
        %1475 = vmatprep.subr.mxu0 0.0
        %v1476 = vand.u32 %v768, 4294901760
        %1477 = vmatpush1.msra.mxu0 %v1476
        %1478 = vmatprep.subr.mxu0 0.0
        %1479 = vmatpush2.msra.mxu0 0.0
        %1480 = vmatprep.subr.mxu0 0.0
        %1481 = vmatpush2.msra.mxu0 0.0
        %1482 = vmatprep.subr.mxu0 0.0
        %1483 = vmatpush2.msra.mxu0 0.0
        %1484 = vmatprep.subr.mxu0 0.0
        %1485 = vmatpush2.msra.mxu0 0.0
        %1486 = vmatprep.subr.mxu0 0.0
        %1487 = vmatpush2.msra.mxu0 0.0
        %1488 = vmatprep.subr.mxu0 0.0
        %1489 = vmatpush2.msra.mxu0 0.0
        %1490 = vmatprep.subr.mxu0 0.0
        %1491 = vmatpush2.msra.mxu0 0.0
        %1492 = vmatprep.subr.mxu0 0.0
        %1493 = vmatpush2.msra.mxu0 0.0
        %1494 = vmatprep.subr.mxu0 0.0
        %1495 = vmatpush2.msra.mxu0 0.0
        %1496 = vmatprep.subr.mxu0 0.0
        %1497 = vmatpush2.msra.mxu0 0.0
        %1498 = vmatprep.subr.mxu0 0.0
        %1499 = vmatpush2.msra.mxu0 0.0
        %1500 = vmatprep.subr.mxu0 0.0
        %1501 = vmatpush2.msra.mxu0 0.0
        %1502 = vmatprep.subr.mxu0 0.0
        %1503 = vmatpush2.msra.mxu0 0.0
        %1504 = vmatprep.subr.mxu0 0.0
        %1505 = vmatpush2.msra.mxu0 0.0
        %1506 = vmatprep.subr.mxu0 0.0
        %1507 = vmatpush2.msra.mxu0 0.0
        %1508 = vmatprep.subr.mxu0 0.0
        %1509 = vmatpush2.msra.mxu0 0.0
        %1510 = vmatprep.mubr.f32.mxu0 0.0
        %v1511 = vand.u32 %v1439, 4294901760
        %v1512 = vsub.f32 %v1439, %v1511
        %v1513 = vand.u32 %v1512, 4294901760
        %v1514 = vsub.f32 %v1512, %v1513
        %v1515 = vand.u32 %v1514, 4294901760
        %1516 = vmatmul.mubr.f32.gmra.mxu0 %v1515
        %v1517 = vpop.f32.mrf.mxu0
        %v1518 = vadd.f32 %v1341, %v1517
        %v1519 = vpop.f32.mrf.mxu0
        %1520 = vdwg.mxu0
        %1521 = vmatprep.subr.mxu0 0.0
        %1522 = vmatpush1.msra.mxu0 0.0
        %1523 = vmatprep.subr.mxu0 0.0
        %1524 = vmatpush1.msra.mxu0 0.0
        %1525 = vmatprep.subr.mxu0 0.0
        %1526 = vmatpush1.msra.mxu0 0.0
        %1527 = vmatprep.subr.mxu0 0.0
        %1528 = vmatpush1.msra.mxu0 0.0
        %1529 = vmatprep.subr.mxu0 0.0
        %1530 = vmatpush1.msra.mxu0 0.0
        %1531 = vmatprep.subr.mxu0 0.0
        %1532 = vmatpush1.msra.mxu0 0.0
        %1533 = vmatprep.subr.mxu0 0.0
        %1534 = vmatpush1.msra.mxu0 0.0
        %1535 = vmatprep.subr.mxu0 0.0
        %1536 = vmatpush1.msra.mxu0 0.0
        %1537 = vmatprep.subr.mxu0 0.0
        %1538 = vmatpush1.msra.mxu0 0.0
        %1539 = vmatprep.subr.mxu0 0.0
        %1540 = vmatpush1.msra.mxu0 0.0
        %1541 = vmatprep.subr.mxu0 0.0
        %1542 = vmatpush1.msra.mxu0 0.0
        %1543 = vmatprep.subr.mxu0 0.0
        %1544 = vmatpush1.msra.mxu0 0.0
        %1545 = vmatprep.subr.mxu0 0.0
        %1546 = vmatpush1.msra.mxu0 0.0
        %1547 = vmatprep.subr.mxu0 0.0
        %1548 = vmatpush1.msra.mxu0 0.0
        %1549 = vmatprep.subr.mxu0 0.0
        %v1550 = vand.u32 %v1442, 4294901760
        %v1551 = vsub.f32 %v1442, %v1550
        %v1552 = vand.u32 %v1551, 4294901760
        %v1553 = vsub.f32 %v1551, %v1552
        %v1554 = vand.u32 %v1553, 4294901760
        %1555 = vmatpush1.msra.mxu0 %v1554
        %1556 = vmatprep.subr.mxu0 0.0
        %v1557 = vand.u32 %v768, 4294901760
        %v1558 = vsub.f32 %v768, %v1557
        %v1559 = vand.u32 %v1558, 4294901760
        %v1560 = vsub.f32 %v1558, %v1559
        %v1561 = vand.u32 %v1560, 4294901760
        %1562 = vmatpush1.msra.mxu0 %v1561
        %1563 = vmatprep.subr.mxu0 0.0
        %1564 = vmatpush2.msra.mxu0 0.0
        %1565 = vmatprep.subr.mxu0 0.0
        %1566 = vmatpush2.msra.mxu0 0.0
        %1567 = vmatprep.subr.mxu0 0.0
        %1568 = vmatpush2.msra.mxu0 0.0
        %1569 = vmatprep.subr.mxu0 0.0
        %1570 = vmatpush2.msra.mxu0 0.0
        %1571 = vmatprep.subr.mxu0 0.0
        %1572 = vmatpush2.msra.mxu0 0.0
        %1573 = vmatprep.subr.mxu0 0.0
        %1574 = vmatpush2.msra.mxu0 0.0
        %1575 = vmatprep.subr.mxu0 0.0
        %1576 = vmatpush2.msra.mxu0 0.0
        %1577 = vmatprep.subr.mxu0 0.0
        %1578 = vmatpush2.msra.mxu0 0.0
        %1579 = vmatprep.subr.mxu0 0.0
        %1580 = vmatpush2.msra.mxu0 0.0
        %1581 = vmatprep.subr.mxu0 0.0
        %1582 = vmatpush2.msra.mxu0 0.0
        %1583 = vmatprep.subr.mxu0 0.0
        %1584 = vmatpush2.msra.mxu0 0.0
        %1585 = vmatprep.subr.mxu0 0.0
        %1586 = vmatpush2.msra.mxu0 0.0
        %1587 = vmatprep.subr.mxu0 0.0
        %1588 = vmatpush2.msra.mxu0 0.0
        %1589 = vmatprep.subr.mxu0 0.0
        %1590 = vmatpush2.msra.mxu0 0.0
        %1591 = vmatprep.subr.mxu0 0.0
        %1592 = vmatpush2.msra.mxu0 0.0
        %1593 = vmatprep.subr.mxu0 0.0
        %1594 = vmatpush2.msra.mxu0 0.0
        %1595 = vmatprep.mubr.f32.mxu0 0.0
        %v1596 = vand.u32 %v1439, 4294901760
        %1597 = vmatmul.mubr.f32.gmra.mxu0 %v1596
        %v1598 = vpop.f32.mrf.mxu0
        %v1599 = vadd.f32 %v1518, %v1598
        %v1600 = vpop.f32.mrf.mxu0
        %1601 = vdwg.mxu0
        %1602 = vmatprep.subr.mxu0 0.0
        %1603 = vmatpush1.msra.mxu0 0.0
        %1604 = vmatprep.subr.mxu0 0.0
        %1605 = vmatpush1.msra.mxu0 0.0
        %1606 = vmatprep.subr.mxu0 0.0
        %1607 = vmatpush1.msra.mxu0 0.0
        %1608 = vmatprep.subr.mxu0 0.0
        %1609 = vmatpush1.msra.mxu0 0.0
        %1610 = vmatprep.subr.mxu0 0.0
        %1611 = vmatpush1.msra.mxu0 0.0
        %1612 = vmatprep.subr.mxu0 0.0
        %1613 = vmatpush1.msra.mxu0 0.0
        %1614 = vmatprep.subr.mxu0 0.0
        %1615 = vmatpush1.msra.mxu0 0.0
        %1616 = vmatprep.subr.mxu0 0.0
        %1617 = vmatpush1.msra.mxu0 0.0
        %1618 = vmatprep.subr.mxu0 0.0
        %1619 = vmatpush1.msra.mxu0 0.0
        %1620 = vmatprep.subr.mxu0 0.0
        %1621 = vmatpush1.msra.mxu0 0.0
        %1622 = vmatprep.subr.mxu0 0.0
        %1623 = vmatpush1.msra.mxu0 0.0
        %1624 = vmatprep.subr.mxu0 0.0
        %1625 = vmatpush1.msra.mxu0 0.0
        %1626 = vmatprep.subr.mxu0 0.0
        %1627 = vmatpush1.msra.mxu0 0.0
        %1628 = vmatprep.subr.mxu0 0.0
        %1629 = vmatpush1.msra.mxu0 0.0
        %1630 = vmatprep.subr.mxu0 0.0
        %v1631 = vand.u32 %v1442, 4294901760
        %v1632 = vsub.f32 %v1442, %v1631
        %1633 = vmatpush1.msra.mxu0 %v1632
        %1634 = vmatprep.subr.mxu0 0.0
        %v1635 = vand.u32 %v768, 4294901760
        %v1636 = vsub.f32 %v768, %v1635
        %1637 = vmatpush1.msra.mxu0 %v1636
        %1638 = vmatprep.subr.mxu0 0.0
        %1639 = vmatpush2.msra.mxu0 0.0
        %1640 = vmatprep.subr.mxu0 0.0
        %1641 = vmatpush2.msra.mxu0 0.0
        %1642 = vmatprep.subr.mxu0 0.0
        %1643 = vmatpush2.msra.mxu0 0.0
        %1644 = vmatprep.subr.mxu0 0.0
        %1645 = vmatpush2.msra.mxu0 0.0
        %1646 = vmatprep.subr.mxu0 0.0
        %1647 = vmatpush2.msra.mxu0 0.0
        %1648 = vmatprep.subr.mxu0 0.0
        %1649 = vmatpush2.msra.mxu0 0.0
        %1650 = vmatprep.subr.mxu0 0.0
        %1651 = vmatpush2.msra.mxu0 0.0
        %1652 = vmatprep.subr.mxu0 0.0
        %1653 = vmatpush2.msra.mxu0 0.0
        %1654 = vmatprep.subr.mxu0 0.0
        %1655 = vmatpush2.msra.mxu0 0.0
        %1656 = vmatprep.subr.mxu0 0.0
        %1657 = vmatpush2.msra.mxu0 0.0
        %1658 = vmatprep.subr.mxu0 0.0
        %1659 = vmatpush2.msra.mxu0 0.0
        %1660 = vmatprep.subr.mxu0 0.0
        %1661 = vmatpush2.msra.mxu0 0.0
        %1662 = vmatprep.subr.mxu0 0.0
        %1663 = vmatpush2.msra.mxu0 0.0
        %1664 = vmatprep.subr.mxu0 0.0
        %1665 = vmatpush2.msra.mxu0 0.0
        %1666 = vmatprep.subr.mxu0 0.0
        %1667 = vmatpush2.msra.mxu0 0.0
        %1668 = vmatprep.subr.mxu0 0.0
        %1669 = vmatpush2.msra.mxu0 0.0
        %1670 = vmatprep.mubr.f32.mxu0 0.0
        %v1671 = vand.u32 %v1439, 4294901760
        %v1672 = vsub.f32 %v1439, %v1671
        %1673 = vmatmul.mubr.f32.gmra.mxu0 %v1672
        %v1674 = vpop.f32.mrf.mxu0
        %v1675 = vadd.f32 %v1599, %v1674
        %v1676 = vpop.f32.mrf.mxu0
        %1677 = vdwg.mxu0
        %1678 = vmatprep.subr.mxu0 0.0
        %1679 = vmatpush1.msra.mxu0 0.0
        %1680 = vmatprep.subr.mxu0 0.0
        %1681 = vmatpush1.msra.mxu0 0.0
        %1682 = vmatprep.subr.mxu0 0.0
        %1683 = vmatpush1.msra.mxu0 0.0
        %1684 = vmatprep.subr.mxu0 0.0
        %1685 = vmatpush1.msra.mxu0 0.0
        %1686 = vmatprep.subr.mxu0 0.0
        %1687 = vmatpush1.msra.mxu0 0.0
        %1688 = vmatprep.subr.mxu0 0.0
        %1689 = vmatpush1.msra.mxu0 0.0
        %1690 = vmatprep.subr.mxu0 0.0
        %1691 = vmatpush1.msra.mxu0 0.0
        %1692 = vmatprep.subr.mxu0 0.0
        %1693 = vmatpush1.msra.mxu0 0.0
        %1694 = vmatprep.subr.mxu0 0.0
        %1695 = vmatpush1.msra.mxu0 0.0
        %1696 = vmatprep.subr.mxu0 0.0
        %1697 = vmatpush1.msra.mxu0 0.0
        %1698 = vmatprep.subr.mxu0 0.0
        %1699 = vmatpush1.msra.mxu0 0.0
        %1700 = vmatprep.subr.mxu0 0.0
        %1701 = vmatpush1.msra.mxu0 0.0
        %1702 = vmatprep.subr.mxu0 0.0
        %1703 = vmatpush1.msra.mxu0 0.0
        %1704 = vmatprep.subr.mxu0 0.0
        %1705 = vmatpush1.msra.mxu0 0.0
        %1706 = vmatprep.subr.mxu0 0.0
        %v1707 = vand.u32 %v1442, 4294901760
        %1708 = vmatpush1.msra.mxu0 %v1707
        %1709 = vmatprep.subr.mxu0 0.0
        %v1710 = vand.u32 %v768, 4294901760
        %1711 = vmatpush1.msra.mxu0 %v1710
        %1712 = vmatprep.subr.mxu0 0.0
        %1713 = vmatpush2.msra.mxu0 0.0
        %1714 = vmatprep.subr.mxu0 0.0
        %1715 = vmatpush2.msra.mxu0 0.0
        %1716 = vmatprep.subr.mxu0 0.0
        %1717 = vmatpush2.msra.mxu0 0.0
        %1718 = vmatprep.subr.mxu0 0.0
        %1719 = vmatpush2.msra.mxu0 0.0
        %1720 = vmatprep.subr.mxu0 0.0
        %1721 = vmatpush2.msra.mxu0 0.0
        %1722 = vmatprep.subr.mxu0 0.0
        %1723 = vmatpush2.msra.mxu0 0.0
        %1724 = vmatprep.subr.mxu0 0.0
        %1725 = vmatpush2.msra.mxu0 0.0
        %1726 = vmatprep.subr.mxu0 0.0
        %1727 = vmatpush2.msra.mxu0 0.0
        %1728 = vmatprep.subr.mxu0 0.0
        %1729 = vmatpush2.msra.mxu0 0.0
        %1730 = vmatprep.subr.mxu0 0.0
        %1731 = vmatpush2.msra.mxu0 0.0
        %1732 = vmatprep.subr.mxu0 0.0
        %1733 = vmatpush2.msra.mxu0 0.0
        %1734 = vmatprep.subr.mxu0 0.0
        %1735 = vmatpush2.msra.mxu0 0.0
        %1736 = vmatprep.subr.mxu0 0.0
        %1737 = vmatpush2.msra.mxu0 0.0
        %1738 = vmatprep.subr.mxu0 0.0
        %1739 = vmatpush2.msra.mxu0 0.0
        %1740 = vmatprep.subr.mxu0 0.0
        %1741 = vmatpush2.msra.mxu0 0.0
        %1742 = vmatprep.subr.mxu0 0.0
        %1743 = vmatpush2.msra.mxu0 0.0
        %1744 = vmatprep.mubr.f32.mxu0 0.0
        %v1745 = vand.u32 %v1439, 4294901760
        %v1746 = vsub.f32 %v1439, %v1745
        %v1747 = vand.u32 %v1746, 4294901760
        %1748 = vmatmul.mubr.f32.gmra.mxu0 %v1747
        %v1749 = vpop.f32.mrf.mxu0
        %v1750 = vadd.f32 %v1675, %v1749
        %v1751 = vpop.f32.mrf.mxu0
        %1752 = vdwg.mxu0
        %1753 = vmatprep.subr.mxu0 0.0
        %1754 = vmatpush1.msra.mxu0 0.0
        %1755 = vmatprep.subr.mxu0 0.0
        %1756 = vmatpush1.msra.mxu0 0.0
        %1757 = vmatprep.subr.mxu0 0.0
        %1758 = vmatpush1.msra.mxu0 0.0
        %1759 = vmatprep.subr.mxu0 0.0
        %1760 = vmatpush1.msra.mxu0 0.0
        %1761 = vmatprep.subr.mxu0 0.0
        %1762 = vmatpush1.msra.mxu0 0.0
        %1763 = vmatprep.subr.mxu0 0.0
        %1764 = vmatpush1.msra.mxu0 0.0
        %1765 = vmatprep.subr.mxu0 0.0
        %1766 = vmatpush1.msra.mxu0 0.0
        %1767 = vmatprep.subr.mxu0 0.0
        %1768 = vmatpush1.msra.mxu0 0.0
        %1769 = vmatprep.subr.mxu0 0.0
        %1770 = vmatpush1.msra.mxu0 0.0
        %1771 = vmatprep.subr.mxu0 0.0
        %1772 = vmatpush1.msra.mxu0 0.0
        %1773 = vmatprep.subr.mxu0 0.0
        %1774 = vmatpush1.msra.mxu0 0.0
        %1775 = vmatprep.subr.mxu0 0.0
        %1776 = vmatpush1.msra.mxu0 0.0
        %1777 = vmatprep.subr.mxu0 0.0
        %1778 = vmatpush1.msra.mxu0 0.0
        %1779 = vmatprep.subr.mxu0 0.0
        %1780 = vmatpush1.msra.mxu0 0.0
        %1781 = vmatprep.subr.mxu0 0.0
        %v1782 = vand.u32 %v1442, 4294901760
        %v1783 = vsub.f32 %v1442, %v1782
        %v1784 = vand.u32 %v1783, 4294901760
        %1785 = vmatpush1.msra.mxu0 %v1784
        %1786 = vmatprep.subr.mxu0 0.0
        %v1787 = vand.u32 %v768, 4294901760
        %v1788 = vsub.f32 %v768, %v1787
        %v1789 = vand.u32 %v1788, 4294901760
        %1790 = vmatpush1.msra.mxu0 %v1789
        %1791 = vmatprep.subr.mxu0 0.0
        %1792 = vmatpush2.msra.mxu0 0.0
        %1793 = vmatprep.subr.mxu0 0.0
        %1794 = vmatpush2.msra.mxu0 0.0
        %1795 = vmatprep.subr.mxu0 0.0
        %1796 = vmatpush2.msra.mxu0 0.0
        %1797 = vmatprep.subr.mxu0 0.0
        %1798 = vmatpush2.msra.mxu0 0.0
        %1799 = vmatprep.subr.mxu0 0.0
        %1800 = vmatpush2.msra.mxu0 0.0
        %1801 = vmatprep.subr.mxu0 0.0
        %1802 = vmatpush2.msra.mxu0 0.0
        %1803 = vmatprep.subr.mxu0 0.0
        %1804 = vmatpush2.msra.mxu0 0.0
        %1805 = vmatprep.subr.mxu0 0.0
        %1806 = vmatpush2.msra.mxu0 0.0
        %1807 = vmatprep.subr.mxu0 0.0
        %1808 = vmatpush2.msra.mxu0 0.0
        %1809 = vmatprep.subr.mxu0 0.0
        %1810 = vmatpush2.msra.mxu0 0.0
        %1811 = vmatprep.subr.mxu0 0.0
        %1812 = vmatpush2.msra.mxu0 0.0
        %1813 = vmatprep.subr.mxu0 0.0
        %1814 = vmatpush2.msra.mxu0 0.0
        %1815 = vmatprep.subr.mxu0 0.0
        %1816 = vmatpush2.msra.mxu0 0.0
        %1817 = vmatprep.subr.mxu0 0.0
        %1818 = vmatpush2.msra.mxu0 0.0
        %1819 = vmatprep.subr.mxu0 0.0
        %1820 = vmatpush2.msra.mxu0 0.0
        %1821 = vmatprep.subr.mxu0 0.0
        %1822 = vmatpush2.msra.mxu0 0.0
        %1823 = vmatprep.mubr.f32.mxu0 0.0
        %v1824 = vand.u32 %v1439, 4294901760
        %1825 = vmatmul.mubr.f32.gmra.mxu0 %v1824
        %v1826 = vpop.f32.mrf.mxu0
        %v1827 = vadd.f32 %v1750, %v1826
        %v1828 = vpop.f32.mrf.mxu0
        %1829 = vdwg.mxu0
        %1830 = vmatprep.subr.mxu0 0.0
        %1831 = vmatpush1.msra.mxu0 0.0
        %1832 = vmatprep.subr.mxu0 0.0
        %1833 = vmatpush1.msra.mxu0 0.0
        %1834 = vmatprep.subr.mxu0 0.0
        %1835 = vmatpush1.msra.mxu0 0.0
        %1836 = vmatprep.subr.mxu0 0.0
        %1837 = vmatpush1.msra.mxu0 0.0
        %1838 = vmatprep.subr.mxu0 0.0
        %1839 = vmatpush1.msra.mxu0 0.0
        %1840 = vmatprep.subr.mxu0 0.0
        %1841 = vmatpush1.msra.mxu0 0.0
        %1842 = vmatprep.subr.mxu0 0.0
        %1843 = vmatpush1.msra.mxu0 0.0
        %1844 = vmatprep.subr.mxu0 0.0
        %1845 = vmatpush1.msra.mxu0 0.0
        %1846 = vmatprep.subr.mxu0 0.0
        %1847 = vmatpush1.msra.mxu0 0.0
        %1848 = vmatprep.subr.mxu0 0.0
        %1849 = vmatpush1.msra.mxu0 0.0
        %1850 = vmatprep.subr.mxu0 0.0
        %1851 = vmatpush1.msra.mxu0 0.0
        %1852 = vmatprep.subr.mxu0 0.0
        %1853 = vmatpush1.msra.mxu0 0.0
        %1854 = vmatprep.subr.mxu0 0.0
        %1855 = vmatpush1.msra.mxu0 0.0
        %1856 = vmatprep.subr.mxu0 0.0
        %1857 = vmatpush1.msra.mxu0 0.0
        %1858 = vmatprep.subr.mxu0 0.0
        %v1859 = vand.u32 %v1442, 4294901760
        %1860 = vmatpush1.msra.mxu0 %v1859
        %1861 = vmatprep.subr.mxu0 0.0
        %v1862 = vand.u32 %v768, 4294901760
        %1863 = vmatpush1.msra.mxu0 %v1862
        %1864 = vmatprep.subr.mxu0 0.0
        %1865 = vmatpush2.msra.mxu0 0.0
        %1866 = vmatprep.subr.mxu0 0.0
        %1867 = vmatpush2.msra.mxu0 0.0
        %1868 = vmatprep.subr.mxu0 0.0
        %1869 = vmatpush2.msra.mxu0 0.0
        %1870 = vmatprep.subr.mxu0 0.0
        %1871 = vmatpush2.msra.mxu0 0.0
        %1872 = vmatprep.subr.mxu0 0.0
        %1873 = vmatpush2.msra.mxu0 0.0
        %1874 = vmatprep.subr.mxu0 0.0
        %1875 = vmatpush2.msra.mxu0 0.0
        %1876 = vmatprep.subr.mxu0 0.0
        %1877 = vmatpush2.msra.mxu0 0.0
        %1878 = vmatprep.subr.mxu0 0.0
        %1879 = vmatpush2.msra.mxu0 0.0
        %1880 = vmatprep.subr.mxu0 0.0
        %1881 = vmatpush2.msra.mxu0 0.0
        %1882 = vmatprep.subr.mxu0 0.0
        %1883 = vmatpush2.msra.mxu0 0.0
        %1884 = vmatprep.subr.mxu0 0.0
        %1885 = vmatpush2.msra.mxu0 0.0
        %1886 = vmatprep.subr.mxu0 0.0
        %1887 = vmatpush2.msra.mxu0 0.0
        %1888 = vmatprep.subr.mxu0 0.0
        %1889 = vmatpush2.msra.mxu0 0.0
        %1890 = vmatprep.subr.mxu0 0.0
        %1891 = vmatpush2.msra.mxu0 0.0
        %1892 = vmatprep.subr.mxu0 0.0
        %1893 = vmatpush2.msra.mxu0 0.0
        %1894 = vmatprep.subr.mxu0 0.0
        %1895 = vmatpush2.msra.mxu0 0.0
        %1896 = vmatprep.mubr.f32.mxu0 0.0
        %v1897 = vand.u32 %v1439, 4294901760
        %1898 = vmatmul.mubr.f32.gmra.mxu0 %v1897
        %v1899 = vpop.f32.mrf.mxu0
        %v1900 = vadd.f32 %v1827, %v1899
        %v1901 = vpop.f32.mrf.mxu0
        %1902 = vdwg.mxu0
        %v1903 = vld [vmem:[%s5] sm:$0xff]
        %v1904 = vld [vmem:[%s5 + $0x8] sm:$0xff]
        %v1905 = vld [vmem:[%s5 + $0x10] sm:$0xff]
        %v1906 = vld [vmem:[%s5 + $0x18] sm:$0xff]
        %v1907 = vld [vmem:[%s5 + $0x20] sm:$0xff]
        %v1908 = vld [vmem:[%s5 + $0x28] sm:$0xff]
        %v1909 = vld [vmem:[%s5 + $0x30] sm:$0xff]
        %v1910 = vld [vmem:[%s5 + $0x38] sm:$0xff]
        %v1911 = vld [vmem:[%s5 + $0x40] sm:$0xff]
        %v1912 = vld [vmem:[%s5 + $0x48] sm:$0xff]
        %v1913 = vld [vmem:[%s5 + $0x50] sm:$0xff]
        %v1914 = vld [vmem:[%s5 + $0x58] sm:$0xff]
        %v1915 = vld [vmem:[%s5 + $0x60] sm:$0xff]
        %v1916 = vld [vmem:[%s5 + $0x68] sm:$0xff]
        %v1917 = vld [vmem:[%s5 + $0x70] sm:$0xff]
        %v1918 = vld [vmem:[%s5 + $0x78] sm:$0xff]
        %1919 = vmatprep.subr.mxu0 0.0
        %v1920 = vand.u32 %v1918, 4294901760
        %1921 = vmatpush1.msra.mxu0 %v1920
        %1922 = vmatprep.subr.mxu0 0.0
        %v1923 = vand.u32 %v1917, 4294901760
        %1924 = vmatpush1.msra.mxu0 %v1923
        %1925 = vmatprep.subr.mxu0 0.0
        %v1926 = vand.u32 %v1916, 4294901760
        %1927 = vmatpush1.msra.mxu0 %v1926
        %1928 = vmatprep.subr.mxu0 0.0
        %v1929 = vand.u32 %v1915, 4294901760
        %1930 = vmatpush1.msra.mxu0 %v1929
        %1931 = vmatprep.subr.mxu0 0.0
        %v1932 = vand.u32 %v1914, 4294901760
        %1933 = vmatpush1.msra.mxu0 %v1932
        %1934 = vmatprep.subr.mxu0 0.0
        %v1935 = vand.u32 %v1913, 4294901760
        %1936 = vmatpush1.msra.mxu0 %v1935
        %1937 = vmatprep.subr.mxu0 0.0
        %v1938 = vand.u32 %v1912, 4294901760
        %1939 = vmatpush1.msra.mxu0 %v1938
        %1940 = vmatprep.subr.mxu0 0.0
        %v1941 = vand.u32 %v1911, 4294901760
        %1942 = vmatpush1.msra.mxu0 %v1941
        %1943 = vmatprep.subr.mxu0 0.0
        %v1944 = vand.u32 %v1910, 4294901760
        %1945 = vmatpush1.msra.mxu0 %v1944
        %1946 = vmatprep.subr.mxu0 0.0
        %v1947 = vand.u32 %v1909, 4294901760
        %1948 = vmatpush1.msra.mxu0 %v1947
        %1949 = vmatprep.subr.mxu0 0.0
        %v1950 = vand.u32 %v1908, 4294901760
        %1951 = vmatpush1.msra.mxu0 %v1950
        %1952 = vmatprep.subr.mxu0 0.0
        %v1953 = vand.u32 %v1907, 4294901760
        %1954 = vmatpush1.msra.mxu0 %v1953
        %1955 = vmatprep.subr.mxu0 0.0
        %v1956 = vand.u32 %v1906, 4294901760
        %1957 = vmatpush1.msra.mxu0 %v1956
        %1958 = vmatprep.subr.mxu0 0.0
        %v1959 = vand.u32 %v1905, 4294901760
        %1960 = vmatpush1.msra.mxu0 %v1959
        %1961 = vmatprep.subr.mxu0 0.0
        %v1962 = vand.u32 %v1904, 4294901760
        %1963 = vmatpush1.msra.mxu0 %v1962
        %1964 = vmatprep.subr.mxu0 0.0
        %v1965 = vand.u32 %v1903, 4294901760
        %1966 = vmatpush1.msra.mxu0 %v1965
        %1967 = vmatprep.subr.mxu0 0.0
        %1968 = vmatpush2.msra.mxu0 0.0
        %1969 = vmatprep.subr.mxu0 0.0
        %1970 = vmatpush2.msra.mxu0 0.0
        %1971 = vmatprep.subr.mxu0 0.0
        %1972 = vmatpush2.msra.mxu0 0.0
        %1973 = vmatprep.subr.mxu0 0.0
        %1974 = vmatpush2.msra.mxu0 0.0
        %1975 = vmatprep.subr.mxu0 0.0
        %1976 = vmatpush2.msra.mxu0 0.0
        %1977 = vmatprep.subr.mxu0 0.0
        %1978 = vmatpush2.msra.mxu0 0.0
        %1979 = vmatprep.subr.mxu0 0.0
        %1980 = vmatpush2.msra.mxu0 0.0
        %1981 = vmatprep.subr.mxu0 0.0
        %1982 = vmatpush2.msra.mxu0 0.0
        %1983 = vmatprep.subr.mxu0 0.0
        %1984 = vmatpush2.msra.mxu0 0.0
        %1985 = vmatprep.subr.mxu0 0.0
        %1986 = vmatpush2.msra.mxu0 0.0
        %1987 = vmatprep.subr.mxu0 0.0
        %1988 = vmatpush2.msra.mxu0 0.0
        %1989 = vmatprep.subr.mxu0 0.0
        %1990 = vmatpush2.msra.mxu0 0.0
        %1991 = vmatprep.subr.mxu0 0.0
        %1992 = vmatpush2.msra.mxu0 0.0
        %1993 = vmatprep.subr.mxu0 0.0
        %1994 = vmatpush2.msra.mxu0 0.0
        %1995 = vmatprep.subr.mxu0 0.0
        %1996 = vmatpush2.msra.mxu0 0.0
        %1997 = vmatprep.subr.mxu0 0.0
        %1998 = vmatpush2.msra.mxu0 0.0
        %1999 = vmatprep.mubr.f32.mxu0 0.0
        %v2000 = vand.u32 %v1900, 4294901760
        %v2001 = vsub.f32 %v1900, %v2000
        %v2002 = vand.u32 %v2001, 4294901760
        %v2003 = vsub.f32 %v2001, %v2002
        %v2004 = vand.u32 %v2003, 4294901760
        %2005 = vmatmul.mubr.f32.gmra.mxu0 %v2004
        %v2006 = vpop.f32.mrf.mxu0
        %v2007 = vadd.f32 0.0, %v2006
        %v2008 = vpop.f32.mrf.mxu0
        %2009 = vdwg.mxu0
        %2010 = vmatprep.subr.mxu0 0.0
        %v2011 = vand.u32 %v1918, 4294901760
        %v2012 = vsub.f32 %v1918, %v2011
        %v2013 = vand.u32 %v2012, 4294901760
        %v2014 = vsub.f32 %v2012, %v2013
        %v2015 = vand.u32 %v2014, 4294901760
        %2016 = vmatpush1.msra.mxu0 %v2015
        %2017 = vmatprep.subr.mxu0 0.0
        %v2018 = vand.u32 %v1917, 4294901760
        %v2019 = vsub.f32 %v1917, %v2018
        %v2020 = vand.u32 %v2019, 4294901760
        %v2021 = vsub.f32 %v2019, %v2020
        %v2022 = vand.u32 %v2021, 4294901760
        %2023 = vmatpush1.msra.mxu0 %v2022
        %2024 = vmatprep.subr.mxu0 0.0
        %v2025 = vand.u32 %v1916, 4294901760
        %v2026 = vsub.f32 %v1916, %v2025
        %v2027 = vand.u32 %v2026, 4294901760
        %v2028 = vsub.f32 %v2026, %v2027
        %v2029 = vand.u32 %v2028, 4294901760
        %2030 = vmatpush1.msra.mxu0 %v2029
        %2031 = vmatprep.subr.mxu0 0.0
        %v2032 = vand.u32 %v1915, 4294901760
        %v2033 = vsub.f32 %v1915, %v2032
        %v2034 = vand.u32 %v2033, 4294901760
        %v2035 = vsub.f32 %v2033, %v2034
        %v2036 = vand.u32 %v2035, 4294901760
        %2037 = vmatpush1.msra.mxu0 %v2036
        %2038 = vmatprep.subr.mxu0 0.0
        %v2039 = vand.u32 %v1914, 4294901760
        %v2040 = vsub.f32 %v1914, %v2039
        %v2041 = vand.u32 %v2040, 4294901760
        %v2042 = vsub.f32 %v2040, %v2041
        %v2043 = vand.u32 %v2042, 4294901760
        %2044 = vmatpush1.msra.mxu0 %v2043
        %2045 = vmatprep.subr.mxu0 0.0
        %v2046 = vand.u32 %v1913, 4294901760
        %v2047 = vsub.f32 %v1913, %v2046
        %v2048 = vand.u32 %v2047, 4294901760
        %v2049 = vsub.f32 %v2047, %v2048
        %v2050 = vand.u32 %v2049, 4294901760
        %2051 = vmatpush1.msra.mxu0 %v2050
        %2052 = vmatprep.subr.mxu0 0.0
        %v2053 = vand.u32 %v1912, 4294901760
        %v2054 = vsub.f32 %v1912, %v2053
        %v2055 = vand.u32 %v2054, 4294901760
        %v2056 = vsub.f32 %v2054, %v2055
        %v2057 = vand.u32 %v2056, 4294901760
        %2058 = vmatpush1.msra.mxu0 %v2057
        %2059 = vmatprep.subr.mxu0 0.0
        %v2060 = vand.u32 %v1911, 4294901760
        %v2061 = vsub.f32 %v1911, %v2060
        %v2062 = vand.u32 %v2061, 4294901760
        %v2063 = vsub.f32 %v2061, %v2062
        %v2064 = vand.u32 %v2063, 4294901760
        %2065 = vmatpush1.msra.mxu0 %v2064
        %2066 = vmatprep.subr.mxu0 0.0
        %v2067 = vand.u32 %v1910, 4294901760
        %v2068 = vsub.f32 %v1910, %v2067
        %v2069 = vand.u32 %v2068, 4294901760
        %v2070 = vsub.f32 %v2068, %v2069
        %v2071 = vand.u32 %v2070, 4294901760
        %2072 = vmatpush1.msra.mxu0 %v2071
        %2073 = vmatprep.subr.mxu0 0.0
        %v2074 = vand.u32 %v1909, 4294901760
        %v2075 = vsub.f32 %v1909, %v2074
        %v2076 = vand.u32 %v2075, 4294901760
        %v2077 = vsub.f32 %v2075, %v2076
        %v2078 = vand.u32 %v2077, 4294901760
        %2079 = vmatpush1.msra.mxu0 %v2078
        %2080 = vmatprep.subr.mxu0 0.0
        %v2081 = vand.u32 %v1908, 4294901760
        %v2082 = vsub.f32 %v1908, %v2081
        %v2083 = vand.u32 %v2082, 4294901760
        %v2084 = vsub.f32 %v2082, %v2083
        %v2085 = vand.u32 %v2084, 4294901760
        %2086 = vmatpush1.msra.mxu0 %v2085
        %2087 = vmatprep.subr.mxu0 0.0
        %v2088 = vand.u32 %v1907, 4294901760
        %v2089 = vsub.f32 %v1907, %v2088
        %v2090 = vand.u32 %v2089, 4294901760
        %v2091 = vsub.f32 %v2089, %v2090
        %v2092 = vand.u32 %v2091, 4294901760
        %2093 = vmatpush1.msra.mxu0 %v2092
        %2094 = vmatprep.subr.mxu0 0.0
        %v2095 = vand.u32 %v1906, 4294901760
        %v2096 = vsub.f32 %v1906, %v2095
        %v2097 = vand.u32 %v2096, 4294901760
        %v2098 = vsub.f32 %v2096, %v2097
        %v2099 = vand.u32 %v2098, 4294901760
        %2100 = vmatpush1.msra.mxu0 %v2099
        %2101 = vmatprep.subr.mxu0 0.0
        %v2102 = vand.u32 %v1905, 4294901760
        %v2103 = vsub.f32 %v1905, %v2102
        %v2104 = vand.u32 %v2103, 4294901760
        %v2105 = vsub.f32 %v2103, %v2104
        %v2106 = vand.u32 %v2105, 4294901760
        %2107 = vmatpush1.msra.mxu0 %v2106
        %2108 = vmatprep.subr.mxu0 0.0
        %v2109 = vand.u32 %v1904, 4294901760
        %v2110 = vsub.f32 %v1904, %v2109
        %v2111 = vand.u32 %v2110, 4294901760
        %v2112 = vsub.f32 %v2110, %v2111
        %v2113 = vand.u32 %v2112, 4294901760
        %2114 = vmatpush1.msra.mxu0 %v2113
        %2115 = vmatprep.subr.mxu0 0.0
        %v2116 = vand.u32 %v1903, 4294901760
        %v2117 = vsub.f32 %v1903, %v2116
        %v2118 = vand.u32 %v2117, 4294901760
        %v2119 = vsub.f32 %v2117, %v2118
        %v2120 = vand.u32 %v2119, 4294901760
        %2121 = vmatpush1.msra.mxu0 %v2120
        %2122 = vmatprep.subr.mxu0 0.0
        %2123 = vmatpush2.msra.mxu0 0.0
        %2124 = vmatprep.subr.mxu0 0.0
        %2125 = vmatpush2.msra.mxu0 0.0
        %2126 = vmatprep.subr.mxu0 0.0
        %2127 = vmatpush2.msra.mxu0 0.0
        %2128 = vmatprep.subr.mxu0 0.0
        %2129 = vmatpush2.msra.mxu0 0.0
        %2130 = vmatprep.subr.mxu0 0.0
        %2131 = vmatpush2.msra.mxu0 0.0
        %2132 = vmatprep.subr.mxu0 0.0
        %2133 = vmatpush2.msra.mxu0 0.0
        %2134 = vmatprep.subr.mxu0 0.0
        %2135 = vmatpush2.msra.mxu0 0.0
        %2136 = vmatprep.subr.mxu0 0.0
        %2137 = vmatpush2.msra.mxu0 0.0
        %2138 = vmatprep.subr.mxu0 0.0
        %2139 = vmatpush2.msra.mxu0 0.0
        %2140 = vmatprep.subr.mxu0 0.0
        %2141 = vmatpush2.msra.mxu0 0.0
        %2142 = vmatprep.subr.mxu0 0.0
        %2143 = vmatpush2.msra.mxu0 0.0
        %2144 = vmatprep.subr.mxu0 0.0
        %2145 = vmatpush2.msra.mxu0 0.0
        %2146 = vmatprep.subr.mxu0 0.0
        %2147 = vmatpush2.msra.mxu0 0.0
        %2148 = vmatprep.subr.mxu0 0.0
        %2149 = vmatpush2.msra.mxu0 0.0
        %2150 = vmatprep.subr.mxu0 0.0
        %2151 = vmatpush2.msra.mxu0 0.0
        %2152 = vmatprep.subr.mxu0 0.0
        %2153 = vmatpush2.msra.mxu0 0.0
        %2154 = vmatprep.mubr.f32.mxu0 0.0
        %v2155 = vand.u32 %v1900, 4294901760
        %2156 = vmatmul.mubr.f32.gmra.mxu0 %v2155
        %v2157 = vpop.f32.mrf.mxu0
        %v2158 = vadd.f32 %v2007, %v2157
        %v2159 = vpop.f32.mrf.mxu0
        %2160 = vdwg.mxu0
        %2161 = vmatprep.subr.mxu0 0.0
        %v2162 = vand.u32 %v1918, 4294901760
        %v2163 = vsub.f32 %v1918, %v2162
        %2164 = vmatpush1.msra.mxu0 %v2163
        %2165 = vmatprep.subr.mxu0 0.0
        %v2166 = vand.u32 %v1917, 4294901760
        %v2167 = vsub.f32 %v1917, %v2166
        %2168 = vmatpush1.msra.mxu0 %v2167
        %2169 = vmatprep.subr.mxu0 0.0
        %v2170 = vand.u32 %v1916, 4294901760
        %v2171 = vsub.f32 %v1916, %v2170
        %2172 = vmatpush1.msra.mxu0 %v2171
        %2173 = vmatprep.subr.mxu0 0.0
        %v2174 = vand.u32 %v1915, 4294901760
        %v2175 = vsub.f32 %v1915, %v2174
        %2176 = vmatpush1.msra.mxu0 %v2175
        %2177 = vmatprep.subr.mxu0 0.0
        %v2178 = vand.u32 %v1914, 4294901760
        %v2179 = vsub.f32 %v1914, %v2178
        %2180 = vmatpush1.msra.mxu0 %v2179
        %2181 = vmatprep.subr.mxu0 0.0
        %v2182 = vand.u32 %v1913, 4294901760
        %v2183 = vsub.f32 %v1913, %v2182
        %2184 = vmatpush1.msra.mxu0 %v2183
        %2185 = vmatprep.subr.mxu0 0.0
        %v2186 = vand.u32 %v1912, 4294901760
        %v2187 = vsub.f32 %v1912, %v2186
        %2188 = vmatpush1.msra.mxu0 %v2187
        %2189 = vmatprep.subr.mxu0 0.0
        %v2190 = vand.u32 %v1911, 4294901760
        %v2191 = vsub.f32 %v1911, %v2190
        %2192 = vmatpush1.msra.mxu0 %v2191
        %2193 = vmatprep.subr.mxu0 0.0
        %v2194 = vand.u32 %v1910, 4294901760
        %v2195 = vsub.f32 %v1910, %v2194
        %2196 = vmatpush1.msra.mxu0 %v2195
        %2197 = vmatprep.subr.mxu0 0.0
        %v2198 = vand.u32 %v1909, 4294901760
        %v2199 = vsub.f32 %v1909, %v2198
        %2200 = vmatpush1.msra.mxu0 %v2199
        %2201 = vmatprep.subr.mxu0 0.0
        %v2202 = vand.u32 %v1908, 4294901760
        %v2203 = vsub.f32 %v1908, %v2202
        %2204 = vmatpush1.msra.mxu0 %v2203
        %2205 = vmatprep.subr.mxu0 0.0
        %v2206 = vand.u32 %v1907, 4294901760
        %v2207 = vsub.f32 %v1907, %v2206
        %2208 = vmatpush1.msra.mxu0 %v2207
        %2209 = vmatprep.subr.mxu0 0.0
        %v2210 = vand.u32 %v1906, 4294901760
        %v2211 = vsub.f32 %v1906, %v2210
        %2212 = vmatpush1.msra.mxu0 %v2211
        %2213 = vmatprep.subr.mxu0 0.0
        %v2214 = vand.u32 %v1905, 4294901760
        %v2215 = vsub.f32 %v1905, %v2214
        %2216 = vmatpush1.msra.mxu0 %v2215
        %2217 = vmatprep.subr.mxu0 0.0
        %v2218 = vand.u32 %v1904, 4294901760
        %v2219 = vsub.f32 %v1904, %v2218
        %2220 = vmatpush1.msra.mxu0 %v2219
        %2221 = vmatprep.subr.mxu0 0.0
        %v2222 = vand.u32 %v1903, 4294901760
        %v2223 = vsub.f32 %v1903, %v2222
        %2224 = vmatpush1.msra.mxu0 %v2223
        %2225 = vmatprep.subr.mxu0 0.0
        %2226 = vmatpush2.msra.mxu0 0.0
        %2227 = vmatprep.subr.mxu0 0.0
        %2228 = vmatpush2.msra.mxu0 0.0
        %2229 = vmatprep.subr.mxu0 0.0
        %2230 = vmatpush2.msra.mxu0 0.0
        %2231 = vmatprep.subr.mxu0 0.0
        %2232 = vmatpush2.msra.mxu0 0.0
        %2233 = vmatprep.subr.mxu0 0.0
        %2234 = vmatpush2.msra.mxu0 0.0
        %2235 = vmatprep.subr.mxu0 0.0
        %2236 = vmatpush2.msra.mxu0 0.0
        %2237 = vmatprep.subr.mxu0 0.0
        %2238 = vmatpush2.msra.mxu0 0.0
        %2239 = vmatprep.subr.mxu0 0.0
        %2240 = vmatpush2.msra.mxu0 0.0
        %2241 = vmatprep.subr.mxu0 0.0
        %2242 = vmatpush2.msra.mxu0 0.0
        %2243 = vmatprep.subr.mxu0 0.0
        %2244 = vmatpush2.msra.mxu0 0.0
        %2245 = vmatprep.subr.mxu0 0.0
        %2246 = vmatpush2.msra.mxu0 0.0
        %2247 = vmatprep.subr.mxu0 0.0
        %2248 = vmatpush2.msra.mxu0 0.0
        %2249 = vmatprep.subr.mxu0 0.0
        %2250 = vmatpush2.msra.mxu0 0.0
        %2251 = vmatprep.subr.mxu0 0.0
        %2252 = vmatpush2.msra.mxu0 0.0
        %2253 = vmatprep.subr.mxu0 0.0
        %2254 = vmatpush2.msra.mxu0 0.0
        %2255 = vmatprep.subr.mxu0 0.0
        %2256 = vmatpush2.msra.mxu0 0.0
        %2257 = vmatprep.mubr.f32.mxu0 0.0
        %v2258 = vand.u32 %v1900, 4294901760
        %v2259 = vsub.f32 %v1900, %v2258
        %2260 = vmatmul.mubr.f32.gmra.mxu0 %v2259
        %v2261 = vpop.f32.mrf.mxu0
        %v2262 = vadd.f32 %v2158, %v2261
        %v2263 = vpop.f32.mrf.mxu0
        %2264 = vdwg.mxu0
        %2265 = vmatprep.subr.mxu0 0.0
        %v2266 = vand.u32 %v1918, 4294901760
        %2267 = vmatpush1.msra.mxu0 %v2266
        %2268 = vmatprep.subr.mxu0 0.0
        %v2269 = vand.u32 %v1917, 4294901760
        %2270 = vmatpush1.msra.mxu0 %v2269
        %2271 = vmatprep.subr.mxu0 0.0
        %v2272 = vand.u32 %v1916, 4294901760
        %2273 = vmatpush1.msra.mxu0 %v2272
        %2274 = vmatprep.subr.mxu0 0.0
        %v2275 = vand.u32 %v1915, 4294901760
        %2276 = vmatpush1.msra.mxu0 %v2275
        %2277 = vmatprep.subr.mxu0 0.0
        %v2278 = vand.u32 %v1914, 4294901760
        %2279 = vmatpush1.msra.mxu0 %v2278
        %2280 = vmatprep.subr.mxu0 0.0
        %v2281 = vand.u32 %v1913, 4294901760
        %2282 = vmatpush1.msra.mxu0 %v2281
        %2283 = vmatprep.subr.mxu0 0.0
        %v2284 = vand.u32 %v1912, 4294901760
        %2285 = vmatpush1.msra.mxu0 %v2284
        %2286 = vmatprep.subr.mxu0 0.0
        %v2287 = vand.u32 %v1911, 4294901760
        %2288 = vmatpush1.msra.mxu0 %v2287
        %2289 = vmatprep.subr.mxu0 0.0
        %v2290 = vand.u32 %v1910, 4294901760
        %2291 = vmatpush1.msra.mxu0 %v2290
        %2292 = vmatprep.subr.mxu0 0.0
        %v2293 = vand.u32 %v1909, 4294901760
        %2294 = vmatpush1.msra.mxu0 %v2293
        %2295 = vmatprep.subr.mxu0 0.0
        %v2296 = vand.u32 %v1908, 4294901760
        %2297 = vmatpush1.msra.mxu0 %v2296
        %2298 = vmatprep.subr.mxu0 0.0
        %v2299 = vand.u32 %v1907, 4294901760
        %2300 = vmatpush1.msra.mxu0 %v2299
        %2301 = vmatprep.subr.mxu0 0.0
        %v2302 = vand.u32 %v1906, 4294901760
        %2303 = vmatpush1.msra.mxu0 %v2302
        %2304 = vmatprep.subr.mxu0 0.0
        %v2305 = vand.u32 %v1905, 4294901760
        %2306 = vmatpush1.msra.mxu0 %v2305
        %2307 = vmatprep.subr.mxu0 0.0
        %v2308 = vand.u32 %v1904, 4294901760
        %2309 = vmatpush1.msra.mxu0 %v2308
        %2310 = vmatprep.subr.mxu0 0.0
        %v2311 = vand.u32 %v1903, 4294901760
        %2312 = vmatpush1.msra.mxu0 %v2311
        %2313 = vmatprep.subr.mxu0 0.0
        %2314 = vmatpush2.msra.mxu0 0.0
        %2315 = vmatprep.subr.mxu0 0.0
        %2316 = vmatpush2.msra.mxu0 0.0
        %2317 = vmatprep.subr.mxu0 0.0
        %2318 = vmatpush2.msra.mxu0 0.0
        %2319 = vmatprep.subr.mxu0 0.0
        %2320 = vmatpush2.msra.mxu0 0.0
        %2321 = vmatprep.subr.mxu0 0.0
        %2322 = vmatpush2.msra.mxu0 0.0
        %2323 = vmatprep.subr.mxu0 0.0
        %2324 = vmatpush2.msra.mxu0 0.0
        %2325 = vmatprep.subr.mxu0 0.0
        %2326 = vmatpush2.msra.mxu0 0.0
        %2327 = vmatprep.subr.mxu0 0.0
        %2328 = vmatpush2.msra.mxu0 0.0
        %2329 = vmatprep.subr.mxu0 0.0
        %2330 = vmatpush2.msra.mxu0 0.0
        %2331 = vmatprep.subr.mxu0 0.0
        %2332 = vmatpush2.msra.mxu0 0.0
        %2333 = vmatprep.subr.mxu0 0.0
        %2334 = vmatpush2.msra.mxu0 0.0
        %2335 = vmatprep.subr.mxu0 0.0
        %2336 = vmatpush2.msra.mxu0 0.0
        %2337 = vmatprep.subr.mxu0 0.0
        %2338 = vmatpush2.msra.mxu0 0.0
        %2339 = vmatprep.subr.mxu0 0.0
        %2340 = vmatpush2.msra.mxu0 0.0
        %2341 = vmatprep.subr.mxu0 0.0
        %2342 = vmatpush2.msra.mxu0 0.0
        %2343 = vmatprep.subr.mxu0 0.0
        %2344 = vmatpush2.msra.mxu0 0.0
        %2345 = vmatprep.mubr.f32.mxu0 0.0
        %v2346 = vand.u32 %v1900, 4294901760
        %v2347 = vsub.f32 %v1900, %v2346
        %v2348 = vand.u32 %v2347, 4294901760
        %2349 = vmatmul.mubr.f32.gmra.mxu0 %v2348
        %v2350 = vpop.f32.mrf.mxu0
        %v2351 = vadd.f32 %v2262, %v2350
        %v2352 = vpop.f32.mrf.mxu0
        %2353 = vdwg.mxu0
        %2354 = vmatprep.subr.mxu0 0.0
        %v2355 = vand.u32 %v1918, 4294901760
        %v2356 = vsub.f32 %v1918, %v2355
        %v2357 = vand.u32 %v2356, 4294901760
        %2358 = vmatpush1.msra.mxu0 %v2357
        %2359 = vmatprep.subr.mxu0 0.0
        %v2360 = vand.u32 %v1917, 4294901760
        %v2361 = vsub.f32 %v1917, %v2360
        %v2362 = vand.u32 %v2361, 4294901760
        %2363 = vmatpush1.msra.mxu0 %v2362
        %2364 = vmatprep.subr.mxu0 0.0
        %v2365 = vand.u32 %v1916, 4294901760
        %v2366 = vsub.f32 %v1916, %v2365
        %v2367 = vand.u32 %v2366, 4294901760
        %2368 = vmatpush1.msra.mxu0 %v2367
        %2369 = vmatprep.subr.mxu0 0.0
        %v2370 = vand.u32 %v1915, 4294901760
        %v2371 = vsub.f32 %v1915, %v2370
        %v2372 = vand.u32 %v2371, 4294901760
        %2373 = vmatpush1.msra.mxu0 %v2372
        %2374 = vmatprep.subr.mxu0 0.0
        %v2375 = vand.u32 %v1914, 4294901760
        %v2376 = vsub.f32 %v1914, %v2375
        %v2377 = vand.u32 %v2376, 4294901760
        %2378 = vmatpush1.msra.mxu0 %v2377
        %2379 = vmatprep.subr.mxu0 0.0
        %v2380 = vand.u32 %v1913, 4294901760
        %v2381 = vsub.f32 %v1913, %v2380
        %v2382 = vand.u32 %v2381, 4294901760
        %2383 = vmatpush1.msra.mxu0 %v2382
        %2384 = vmatprep.subr.mxu0 0.0
        %v2385 = vand.u32 %v1912, 4294901760
        %v2386 = vsub.f32 %v1912, %v2385
        %v2387 = vand.u32 %v2386, 4294901760
        %2388 = vmatpush1.msra.mxu0 %v2387
        %2389 = vmatprep.subr.mxu0 0.0
        %v2390 = vand.u32 %v1911, 4294901760
        %v2391 = vsub.f32 %v1911, %v2390
        %v2392 = vand.u32 %v2391, 4294901760
        %2393 = vmatpush1.msra.mxu0 %v2392
        %2394 = vmatprep.subr.mxu0 0.0
        %v2395 = vand.u32 %v1910, 4294901760
        %v2396 = vsub.f32 %v1910, %v2395
        %v2397 = vand.u32 %v2396, 4294901760
        %2398 = vmatpush1.msra.mxu0 %v2397
        %2399 = vmatprep.subr.mxu0 0.0
        %v2400 = vand.u32 %v1909, 4294901760
        %v2401 = vsub.f32 %v1909, %v2400
        %v2402 = vand.u32 %v2401, 4294901760
        %2403 = vmatpush1.msra.mxu0 %v2402
        %2404 = vmatprep.subr.mxu0 0.0
        %v2405 = vand.u32 %v1908, 4294901760
        %v2406 = vsub.f32 %v1908, %v2405
        %v2407 = vand.u32 %v2406, 4294901760
        %2408 = vmatpush1.msra.mxu0 %v2407
        %2409 = vmatprep.subr.mxu0 0.0
        %v2410 = vand.u32 %v1907, 4294901760
        %v2411 = vsub.f32 %v1907, %v2410
        %v2412 = vand.u32 %v2411, 4294901760
        %2413 = vmatpush1.msra.mxu0 %v2412
        %2414 = vmatprep.subr.mxu0 0.0
        %v2415 = vand.u32 %v1906, 4294901760
        %v2416 = vsub.f32 %v1906, %v2415
        %v2417 = vand.u32 %v2416, 4294901760
        %2418 = vmatpush1.msra.mxu0 %v2417
        %2419 = vmatprep.subr.mxu0 0.0
        %v2420 = vand.u32 %v1905, 4294901760
        %v2421 = vsub.f32 %v1905, %v2420
        %v2422 = vand.u32 %v2421, 4294901760
        %2423 = vmatpush1.msra.mxu0 %v2422
        %2424 = vmatprep.subr.mxu0 0.0
        %v2425 = vand.u32 %v1904, 4294901760
        %v2426 = vsub.f32 %v1904, %v2425
        %v2427 = vand.u32 %v2426, 4294901760
        %2428 = vmatpush1.msra.mxu0 %v2427
        %2429 = vmatprep.subr.mxu0 0.0
        %v2430 = vand.u32 %v1903, 4294901760
        %v2431 = vsub.f32 %v1903, %v2430
        %v2432 = vand.u32 %v2431, 4294901760
        %2433 = vmatpush1.msra.mxu0 %v2432
        %2434 = vmatprep.subr.mxu0 0.0
        %2435 = vmatpush2.msra.mxu0 0.0
        %2436 = vmatprep.subr.mxu0 0.0
        %2437 = vmatpush2.msra.mxu0 0.0
        %2438 = vmatprep.subr.mxu0 0.0
        %2439 = vmatpush2.msra.mxu0 0.0
        %2440 = vmatprep.subr.mxu0 0.0
        %2441 = vmatpush2.msra.mxu0 0.0
        %2442 = vmatprep.subr.mxu0 0.0
        %2443 = vmatpush2.msra.mxu0 0.0
        %2444 = vmatprep.subr.mxu0 0.0
        %2445 = vmatpush2.msra.mxu0 0.0
        %2446 = vmatprep.subr.mxu0 0.0
        %2447 = vmatpush2.msra.mxu0 0.0
        %2448 = vmatprep.subr.mxu0 0.0
        %2449 = vmatpush2.msra.mxu0 0.0
        %2450 = vmatprep.subr.mxu0 0.0
        %2451 = vmatpush2.msra.mxu0 0.0
        %2452 = vmatprep.subr.mxu0 0.0
        %2453 = vmatpush2.msra.mxu0 0.0
        %2454 = vmatprep.subr.mxu0 0.0
        %2455 = vmatpush2.msra.mxu0 0.0
        %2456 = vmatprep.subr.mxu0 0.0
        %2457 = vmatpush2.msra.mxu0 0.0
        %2458 = vmatprep.subr.mxu0 0.0
        %2459 = vmatpush2.msra.mxu0 0.0
        %2460 = vmatprep.subr.mxu0 0.0
        %2461 = vmatpush2.msra.mxu0 0.0
        %2462 = vmatprep.subr.mxu0 0.0
        %2463 = vmatpush2.msra.mxu0 0.0
        %2464 = vmatprep.subr.mxu0 0.0
        %2465 = vmatpush2.msra.mxu0 0.0
        %2466 = vmatprep.mubr.f32.mxu0 0.0
        %v2467 = vand.u32 %v1900, 4294901760
        %2468 = vmatmul.mubr.f32.gmra.mxu0 %v2467
        %v2469 = vpop.f32.mrf.mxu0
        %v2470 = vadd.f32 %v2351, %v2469
        %v2471 = vpop.f32.mrf.mxu0
        %2472 = vdwg.mxu0
        %2473 = vmatprep.subr.mxu0 0.0
        %v2474 = vand.u32 %v1918, 4294901760
        %2475 = vmatpush1.msra.mxu0 %v2474
        %2476 = vmatprep.subr.mxu0 0.0
        %v2477 = vand.u32 %v1917, 4294901760
        %2478 = vmatpush1.msra.mxu0 %v2477
        %2479 = vmatprep.subr.mxu0 0.0
        %v2480 = vand.u32 %v1916, 4294901760
        %2481 = vmatpush1.msra.mxu0 %v2480
        %2482 = vmatprep.subr.mxu0 0.0
        %v2483 = vand.u32 %v1915, 4294901760
        %2484 = vmatpush1.msra.mxu0 %v2483
        %2485 = vmatprep.subr.mxu0 0.0
        %v2486 = vand.u32 %v1914, 4294901760
        %2487 = vmatpush1.msra.mxu0 %v2486
        %2488 = vmatprep.subr.mxu0 0.0
        %v2489 = vand.u32 %v1913, 4294901760
        %2490 = vmatpush1.msra.mxu0 %v2489
        %2491 = vmatprep.subr.mxu0 0.0
        %v2492 = vand.u32 %v1912, 4294901760
        %2493 = vmatpush1.msra.mxu0 %v2492
        %2494 = vmatprep.subr.mxu0 0.0
        %v2495 = vand.u32 %v1911, 4294901760
        %2496 = vmatpush1.msra.mxu0 %v2495
        %2497 = vmatprep.subr.mxu0 0.0
        %v2498 = vand.u32 %v1910, 4294901760
        %2499 = vmatpush1.msra.mxu0 %v2498
        %2500 = vmatprep.subr.mxu0 0.0
        %v2501 = vand.u32 %v1909, 4294901760
        %2502 = vmatpush1.msra.mxu0 %v2501
        %2503 = vmatprep.subr.mxu0 0.0
        %v2504 = vand.u32 %v1908, 4294901760
        %2505 = vmatpush1.msra.mxu0 %v2504
        %2506 = vmatprep.subr.mxu0 0.0
        %v2507 = vand.u32 %v1907, 4294901760
        %2508 = vmatpush1.msra.mxu0 %v2507
        %2509 = vmatprep.subr.mxu0 0.0
        %v2510 = vand.u32 %v1906, 4294901760
        %2511 = vmatpush1.msra.mxu0 %v2510
        %2512 = vmatprep.subr.mxu0 0.0
        %v2513 = vand.u32 %v1905, 4294901760
        %2514 = vmatpush1.msra.mxu0 %v2513
        %2515 = vmatprep.subr.mxu0 0.0
        %v2516 = vand.u32 %v1904, 4294901760
        %2517 = vmatpush1.msra.mxu0 %v2516
        %2518 = vmatprep.subr.mxu0 0.0
        %v2519 = vand.u32 %v1903, 4294901760
        %2520 = vmatpush1.msra.mxu0 %v2519
        %2521 = vmatprep.subr.mxu0 0.0
        %2522 = vmatpush2.msra.mxu0 0.0
        %2523 = vmatprep.subr.mxu0 0.0
        %2524 = vmatpush2.msra.mxu0 0.0
        %2525 = vmatprep.subr.mxu0 0.0
        %2526 = vmatpush2.msra.mxu0 0.0
        %2527 = vmatprep.subr.mxu0 0.0
        %2528 = vmatpush2.msra.mxu0 0.0
        %2529 = vmatprep.subr.mxu0 0.0
        %2530 = vmatpush2.msra.mxu0 0.0
        %2531 = vmatprep.subr.mxu0 0.0
        %2532 = vmatpush2.msra.mxu0 0.0
        %2533 = vmatprep.subr.mxu0 0.0
        %2534 = vmatpush2.msra.mxu0 0.0
        %2535 = vmatprep.subr.mxu0 0.0
        %2536 = vmatpush2.msra.mxu0 0.0
        %2537 = vmatprep.subr.mxu0 0.0
        %2538 = vmatpush2.msra.mxu0 0.0
        %2539 = vmatprep.subr.mxu0 0.0
        %2540 = vmatpush2.msra.mxu0 0.0
        %2541 = vmatprep.subr.mxu0 0.0
        %2542 = vmatpush2.msra.mxu0 0.0
        %2543 = vmatprep.subr.mxu0 0.0
        %2544 = vmatpush2.msra.mxu0 0.0
        %2545 = vmatprep.subr.mxu0 0.0
        %2546 = vmatpush2.msra.mxu0 0.0
        %2547 = vmatprep.subr.mxu0 0.0
        %2548 = vmatpush2.msra.mxu0 0.0
        %2549 = vmatprep.subr.mxu0 0.0
        %2550 = vmatpush2.msra.mxu0 0.0
        %2551 = vmatprep.subr.mxu0 0.0
        %2552 = vmatpush2.msra.mxu0 0.0
        %2553 = vmatprep.mubr.f32.mxu0 0.0
        %v2554 = vand.u32 %v1900, 4294901760
        %2555 = vmatmul.mubr.f32.gmra.mxu0 %v2554
        %v2556 = vpop.f32.mrf.mxu0
        %v2557 = vadd.f32 %v2470, %v2556
        %v2558 = vpop.f32.mrf.mxu0
        %2559 = vdwg.mxu0
        %2560 = vst [vmem:[%s298] sm:$0xff] %v2557
        %s2561 = sand.u32 %s175, 1
        %s2562 = scalar_lea.sflag [#allocation4], %s2561
        %s2563 = sand.u32 %s175, 1
        %s2564 = smul.addr %s2563, 8
        %s2565 = scalar_lea.vmem [#allocation5], %s2564
        // Predicated region
        $region49: #{tpu_custom_call.1} parent=43 // pred_check
          %p2566 = pneg %p185
        $region50: #{tpu_custom_call.1} parent=43 // pred_check_branch
          %2568 = sbr.rel (%p2566) target = $region52
        $region51: #{tpu_custom_call.1} parent=43 // pred_region
          %s2570 = ssub.s32 128, 128
          %2571 = vsyncadd %s2562, %s2570
          %s2572 = smul.addr %s21, 128
          %s2573 = scalar_lea.hbm %s6, %s2572
          %s2575 = sshll.u32 %s2565, 4
          %s2576 = int_to_ptr.vmem [resolvable:$true] %s2575
          %2578 = dma.vmem_to_hbm [thread:$0]  %s2576, 128, %s2573, %s2562
        $region52: #{tpu_custom_call.1} parent=43 // pred_fallthru
          _
      $region44: #{tpu_custom_call.1} parent=5 // pred_fallthru
        _
      %p2579 = scmp.le.s32.totalorder 2, %s16
      // Predicated region
      $region53: #{tpu_custom_call.1} parent=5 // pred_check
        %p2580 = pneg %p2579
      $region54: #{tpu_custom_call.1} parent=5 // pred_check_branch
        %2582 = sbr.rel (%p2580) target = $region56
      $region55: #{tpu_custom_call.1} parent=5 // pred_region
        %s2583 = ssub.s32 %s16, 2
        // Predicated region
        $region57: #{tpu_custom_call.1} parent=55 // pred_check
          %p2584 = pneg %p191
        $region58: #{tpu_custom_call.1} parent=55 // pred_check_branch
          %2586 = sbr.rel (%p2584) target = $region60
        $region59: #{tpu_custom_call.1} parent=55 // pred_region
          %s2587 = sand.u32 %s176, 1
          %s2588 = scalar_lea.sflag [#allocation4], %s2587
          %s2589 = sand.u32 %s176, 1
          %s2590 = smul.addr %s2589, 8
          %s2591 = scalar_lea.vmem [#allocation5], %s2590
          %2592 = dma.done %s2588, 128
        $region60: #{tpu_custom_call.1} parent=55 // pred_fallthru
          _
      $region56: #{tpu_custom_call.1} parent=5 // pred_fallthru
        _
    $region6: #{tpu_custom_call.1} parent=1 // loop_footer
      %s20 = sadd.s32 1, %s16
    $region7: #{tpu_custom_call.1} parent=1 // loop_footer_branch
      %15 = sbr.rel target = $region3
    $region8: #{tpu_custom_call.1} parent=1 // loop_exit
      _
    %2593 = vsyncpa [#allocation3], 1
    %s2594 = scalar_lea.sflag [#allocation3], 1
    %2595 = vsyncpa %s2594, 1
    %2596 = vsyncpa [#allocation4], 1
    %s2597 = scalar_lea.sflag [#allocation4], 1
    %2598 = vsyncpa %s2597, 1

</llo_original>
